<compile_context>
chip_gen: v7x
topology: tpu7x:2x2x1
jax: 0.10.0
libtpu: 0.0.40
codegen_flags: <defaults>
</compile_context>

<pallas_src>
import functools

import jax
import jax.numpy as jnp
from jax.experimental import pallas as pl
from jax.experimental.pallas import tpu as pltpu


def _conv_im2col_kernel(x_ref, w_ref, o_ref, *, K, OH, OW, Cin):
    # x_ref: (1, H, W, Cin)  one NHWC image in VMEM
    # w_ref: (K*K*Cin, Cout) flattened HWIO weight in VMEM
    # o_ref: (1, OH*OW, Cout)
    x = x_ref[0]  # (H, W, Cin)

    # Build the im2col patch matrix once: for each (kh, kw) take the shifted
    # (OH, OW, Cin) window, concatenate along channels -> (OH, OW, K*K*Cin),
    # then a single collapse of the two spatial dims -> (OH*OW, K*K*Cin).
    cols = [x[kh:kh + OH, kw:kw + OW, :] for kh in range(K) for kw in range(K)]
    patch = jnp.concatenate(cols, axis=-1)            # (OH, OW, K*K*Cin)
    patch = patch.reshape(OH * OW, K * K * Cin)       # (OH*OW, K*K*Cin)

    # One MXU contraction, f32 accumulate.
    acc = jnp.dot(patch, w_ref[...], preferred_element_type=jnp.float32)

    o_ref[0] = acc.astype(o_ref.dtype)                # (OH*OW, Cout)


def conv2d_pallas(x_nchw, w_oihw):
    """Equivalent of nn.Conv2d(stride=1, pad=0, dilation=1, groups=1, bias=False).

    x_nchw: (N, Cin, H, W) float32 (PyTorch layout)
    w_oihw: (Cout, Cin, K, K) float32 (PyTorch layout)
    returns (N, Cout, OH, OW) float32.
    """
    N, Cin, H, W = x_nchw.shape
    Cout, Cin2, K, K2 = w_oihw.shape
    assert Cin == Cin2 and K == K2
    OH, OW = H - K + 1, W - K + 1

    # Layout glue (not the hot path): NHWC activations, (K*K*Cin, Cout) weight.
    # Column order of the im2col patch is (kh, kw, cin); match it here.
    x_nhwc = jnp.transpose(x_nchw, (0, 2, 3, 1))
    w_flat = jnp.transpose(w_oihw, (2, 3, 1, 0)).reshape(K * K * Cin, Cout)

    kernel = functools.partial(_conv_im2col_kernel, K=K, OH=OH, OW=OW, Cin=Cin)

    out_flat = pl.pallas_call(
        kernel,
        out_shape=jax.ShapeDtypeStruct((N, OH * OW, Cout), x_nchw.dtype),
        grid_spec=pltpu.PrefetchScalarGridSpec(
            num_scalar_prefetch=0,
            grid=(N,),
            in_specs=[
                pl.BlockSpec((1, H, W, Cin), lambda n: (n, 0, 0, 0)),
                pl.BlockSpec((K * K * Cin, Cout), lambda n: (0, 0)),
            ],
            out_specs=pl.BlockSpec((1, OH * OW, Cout), lambda n: (n, 0, 0)),
        ),
        compiler_params=pltpu.CompilerParams(
            dimension_semantics=("parallel",)),
    )(x_nhwc, w_flat)

    # Wrapper-side un-flatten + back to PyTorch NCHW.
    out_nhwc = out_flat.reshape(N, OH, OW, Cout)
    return jnp.transpose(out_nhwc, (0, 3, 1, 2))


if __name__ == "__main__":
    # Small shapes consistent with the module: square input, square kernel.
    N, Cin, H, W = 2, 4, 16, 16
    Cout, K = 8, 3

    key = jax.random.PRNGKey(0)
    kx, kw = jax.random.split(key)

    # PyTorch-style NCHW input + OIHW weight, deterministic init.
    x_nchw = jax.random.normal(kx, (N, Cin, H, W), dtype=jnp.float32)
    w_oihw = jax.random.normal(kw, (Cout, Cin, K, K), dtype=jnp.float32) * 0.1

    out_nchw = conv2d_pallas(x_nchw, w_oihw)
    jax.block_until_ready(out_nchw)

    # Reference check against XLA's conv (same semantics as nn.Conv2d).
    ref = jax.lax.conv_general_dilated(
        x_nchw, w_oihw, window_strides=(1, 1), padding="VALID",
        dimension_numbers=("NCHW", "OIHW", "NCHW"))
    assert out_nchw.shape == ref.shape == (N, Cout, H - K + 1, W - K + 1)
    assert jnp.allclose(out_nchw, ref, atol=1e-4, rtol=1e-4)

    print("KERNEL_OK")
</pallas_src>

<mosaic_0001>
module attributes {stable_mosaic.version = 11 : i64} {
  func.func @_conv_im2col_kernel(%arg0: i32, %arg1: memref<1x16x16x4xf32, #tpu.memory_space<vmem>>, %arg2: memref<36x8xf32, #tpu.memory_space<vmem>>, %arg3: memref<1x196x8xf32, #tpu.memory_space<vmem>>) attributes {dimension_semantics = [#tpu.dimension_semantics<parallel>], iteration_bounds = array<i64: 2>, scalar_prefetch = 0 : i64, scratch_operands = 0 : i64, tpu.core_type = #tpu.core_type<tc>, window_params = [{transform_indices = @transform_0, window_bounds = array<i64: 1, 16, 16, 4>}, {pipeline_mode = #tpu.pipeline_mode<synchronous>, transform_indices = @transform_1, window_bounds = array<i64: 36, 8>}, {transform_indices = @transform_2, window_bounds = array<i64: 1, 196, 8>}]} {
    %c0 = arith.constant 0 : index
    %c0_0 = arith.constant 0 : index
    %c0_1 = arith.constant 0 : index
    %c0_2 = arith.constant 0 : index
    %0 = vector.load %arg1[%c0, %c0_0, %c0_1, %c0_2] : memref<1x16x16x4xf32, #tpu.memory_space<vmem>>, vector<1x16x16x4xf32>
    %1 = vector.shape_cast %0 : vector<1x16x16x4xf32> to vector<16x16x4xf32>
    %2 = vector.extract_strided_slice %1 {offsets = [0, 0, 0], sizes = [14, 14, 4], strides = [1, 1, 1]} : vector<16x16x4xf32> to vector<14x14x4xf32>
    %3 = vector.extract_strided_slice %1 {offsets = [0, 1, 0], sizes = [14, 14, 4], strides = [1, 1, 1]} : vector<16x16x4xf32> to vector<14x14x4xf32>
    %4 = vector.extract_strided_slice %1 {offsets = [0, 2, 0], sizes = [14, 14, 4], strides = [1, 1, 1]} : vector<16x16x4xf32> to vector<14x14x4xf32>
    %5 = vector.extract_strided_slice %1 {offsets = [1, 0, 0], sizes = [14, 14, 4], strides = [1, 1, 1]} : vector<16x16x4xf32> to vector<14x14x4xf32>
    %6 = vector.extract_strided_slice %1 {offsets = [1, 1, 0], sizes = [14, 14, 4], strides = [1, 1, 1]} : vector<16x16x4xf32> to vector<14x14x4xf32>
    %7 = vector.extract_strided_slice %1 {offsets = [1, 2, 0], sizes = [14, 14, 4], strides = [1, 1, 1]} : vector<16x16x4xf32> to vector<14x14x4xf32>
    %8 = vector.extract_strided_slice %1 {offsets = [2, 0, 0], sizes = [14, 14, 4], strides = [1, 1, 1]} : vector<16x16x4xf32> to vector<14x14x4xf32>
    %9 = vector.extract_strided_slice %1 {offsets = [2, 1, 0], sizes = [14, 14, 4], strides = [1, 1, 1]} : vector<16x16x4xf32> to vector<14x14x4xf32>
    %10 = vector.extract_strided_slice %1 {offsets = [2, 2, 0], sizes = [14, 14, 4], strides = [1, 1, 1]} : vector<16x16x4xf32> to vector<14x14x4xf32>
    %11 = tpu.concatenate %2, %3, %4, %5, %6, %7, %8, %9, %10 in 2 : vector<14x14x4xf32>, vector<14x14x4xf32>, vector<14x14x4xf32>, vector<14x14x4xf32>, vector<14x14x4xf32>, vector<14x14x4xf32>, vector<14x14x4xf32>, vector<14x14x4xf32>, vector<14x14x4xf32> -> vector<14x14x36xf32>
    %12 = vector.shape_cast %11 : vector<14x14x36xf32> to vector<196x36xf32>
    %c0_3 = arith.constant 0 : index
    %c0_4 = arith.constant 0 : index
    %13 = vector.load %arg2[%c0_3, %c0_4] : memref<36x8xf32, #tpu.memory_space<vmem>>, vector<36x8xf32>
    %cst = arith.constant dense<0.000000e+00> : vector<196x8xf32>
    %14 = tpu.matmul %12, %13, %cst {dimension_numbers = #tpu.dot_dimension_numbers<[1], [0], [0], [1], [0, 0, 1, 1], [], []>} : vector<196x36xf32>, vector<36x8xf32>, vector<196x8xf32> -> vector<196x8xf32>
    %c0_5 = arith.constant 0 : index
    %c0_6 = arith.constant 0 : index
    %c0_7 = arith.constant 0 : index
    %15 = vector.load %arg3[%c0_5, %c0_6, %c0_7] : memref<1x196x8xf32, #tpu.memory_space<vmem>>, vector<1x196x8xf32>
    %16 = vector.shape_cast %15 : vector<1x196x8xf32> to vector<196x8xf32>
    %17 = vector.shape_cast %14 : vector<196x8xf32> to vector<1x196x8xf32>
    tpu.vector_store %arg3[%c0_5, %c0_6, %c0_7], %17 {strides = array<i32>} : memref<1x196x8xf32, #tpu.memory_space<vmem>>, vector<1x196x8xf32>,
    return
  }
  func.func @transform_0(%arg0: i32) -> (i32, i32, i32, i32) {
    %c0_i32 = arith.constant 0 : i32
    %c0_i32_0 = arith.constant 0 : i32
    %c0_i32_1 = arith.constant 0 : i32
    %c0_i32_2 = arith.constant 0 : i32
    return %arg0, %c0_i32, %c0_i32_0, %c0_i32_1 : i32, i32, i32, i32
  }
  func.func @transform_1(%arg0: i32) -> (i32, i32) {
    %c0_i32 = arith.constant 0 : i32
    %c0_i32_0 = arith.constant 0 : i32
    %c0_i32_1 = arith.constant 0 : i32
    return %c0_i32, %c0_i32_0 : i32, i32
  }
  func.func @transform_2(%arg0: i32) -> (i32, i32, i32) {
    %c0_i32 = arith.constant 0 : i32
    %c0_i32_0 = arith.constant 0 : i32
    %c0_i32_1 = arith.constant 0 : i32
    return %arg0, %c0_i32, %c0_i32_0 : i32, i32, i32
  }
}

</mosaic_0001>

<llo_original>
// kernel: tpu_custom_call.1
$region0: #{tpu_custom_call.1}
  #allocation0 [shape = 'u32[]', space=smem, size = 0x4, offset = 0x4, fixed_abs, tag = 'smem constant byte address 0x4 - core index']
  #allocation1 [shape = 'u32[144,128]{1,0:T(1,128)}', space=vmem, size = 0x12000, scoped, tag = 'internal scratch']
  %s0 = inlined_call_operand.vmem [shape: f32[2,16,16,4], index: 0, kind: input, shape index: {}]
  %s1 = inlined_call_operand.vmem [shape: f32[36,8], index: 1, kind: input, shape index: {}]
  %s2 = inlined_call_operand.vmem [shape: f32[2,196,8], index: 2, kind: output, shape index: {}]
  %s3 = sld [smem:[#allocation0]]
  $region41: #{tpu_custom_call.1} parent=0
    _
  %s5 = ssub.s32 1, %s3
  %s6 = scalar_select 0, %s5, %s3
  loop: start=0, step=1, limit=4
  $region2: #{tpu_custom_call.1} parent=0 // loop_pre_header
    _
  $region3: #{tpu_custom_call.1} parent=0 // loop_header
    %s8 = sphi 0, %s12
    %p9 = scmp.ge.s32.totalorder %s8, 4
    %s18 = sphi 0, %s20
    %s21 = sphi 0, %s18
    %s22 = sphi 0, %s21
    %s38 = sphi 0, %s22
    %s42 = sphi 0, %s42
    %s44 = sphi 0, %s42
    %s45 = sphi 0, %s44
    %s59 = sphi 0, %s45
    %s65 = sphi 0, %s67
    %s68 = sphi 0, %s65
    %s69 = sphi 0, %s68
    %s85 = sphi 0, %s69
  $region4: #{tpu_custom_call.1} parent=0 // loop_header_branch
    %11 = sbr.rel (%p9) target = $region8
  $region5: #{tpu_custom_call.1} parent=0 // loop_body
    %s13 = ssub.s32 %s8, 1
    %s14 = ssub.s32 %s8, 2
    %s15 = sadd.s32 %s8, 1
    %s16 = ssub.s32 %s8, %s15
    %p17 = scmp.eq.s32.totalorder %s16, 0
    %s19 = sadd.s32 %s18, 1
    %s20 = scalar_select %p17, %s18, %s19
    %p23 = pneg %p17
    %p24 = scmp.eq.s32.totalorder %s8, 1
    %p25 = por %p23, %p24
    %p26 = scmp.ne.s32.totalorder %s18, %s21
    %p27 = scmp.eq.s32.totalorder %s8, 0
    %p28 = por %p26, %p27
    %p29 = scmp.ne.s32.totalorder %s18, %s21
    %p30 = scmp.eq.s32.totalorder %s13, 1
    %p31 = por %p29, %p30
    %p32 = scmp.ne.s32.totalorder %s21, %s22
    %p33 = scmp.eq.s32.totalorder %s13, 0
    %p34 = por %p32, %p33
    %p35 = scmp.ne.s32.totalorder %s21, %s22
    %p36 = scmp.eq.s32.totalorder %s14, 1
    %p37 = por %p35, %p36
    %p39 = scmp.ne.s32.totalorder %s22, %s38
    %p40 = scmp.eq.s32.totalorder %s14, 0
    %p41 = por %p39, %p40
    %s43 = sadd.s32 %s42, 1
    %p46 = scmp.eq.s32.totalorder %s8, 1
    %p47 = scmp.ne.s32.totalorder %s42, %s44
    %p48 = scmp.eq.s32.totalorder %s8, 0
    %p49 = por %p47, %p48
    %p50 = scmp.ne.s32.totalorder %s42, %s44
    %p51 = scmp.eq.s32.totalorder %s13, 1
    %p52 = por %p50, %p51
    %p53 = scmp.ne.s32.totalorder %s44, %s45
    %p54 = scmp.eq.s32.totalorder %s13, 0
    %p55 = por %p53, %p54
    %p56 = scmp.ne.s32.totalorder %s44, %s45
    %p57 = scmp.eq.s32.totalorder %s14, 1
    %p58 = por %p56, %p57
    %p60 = scmp.ne.s32.totalorder %s45, %s59
    %p61 = scmp.eq.s32.totalorder %s14, 0
    %p62 = por %p60, %p61
    %s63 = ssub.s32 %s8, %s15
    %p64 = scmp.eq.s32.totalorder %s63, 0
    %s66 = sadd.s32 %s65, 1
    %s67 = scalar_select %p64, %s65, %s66
    %p70 = pneg %p64
    %p71 = scmp.eq.s32.totalorder %s8, 1
    %p72 = por %p70, %p71
    %p73 = scmp.ne.s32.totalorder %s65, %s68
    %p74 = scmp.eq.s32.totalorder %s8, 0
    %p75 = por %p73, %p74
    %p76 = scmp.ne.s32.totalorder %s65, %s68
    %p77 = scmp.eq.s32.totalorder %s13, 1
    %p78 = por %p76, %p77
    %p79 = scmp.ne.s32.totalorder %s68, %s69
    %p80 = scmp.eq.s32.totalorder %s13, 0
    %p81 = por %p79, %p80
    %p82 = scmp.ne.s32.totalorder %s68, %s69
    %p83 = scmp.eq.s32.totalorder %s14, 1
    %p84 = por %p82, %p83
    %p86 = scmp.ne.s32.totalorder %s69, %s85
    %p87 = scmp.eq.s32.totalorder %s14, 0
    %p88 = por %p86, %p87
    %p89 = scmp.le.s32.totalorder 1, %s8
    %p90 = scmp.lt.s32.totalorder %s8, 3
    %p91 = pnand %p89, %p90
    %p92 = pneg %p91
    // Predicated region
    $region9: #{tpu_custom_call.1} parent=5 // pred_check
      _
    $region10: #{tpu_custom_call.1} parent=5 // pred_check_branch
      %94 = sbr.rel (%p91) target = $region12
    $region11: #{tpu_custom_call.1} parent=5 // pred_region
      %s95 = ssub.s32 %s8, 1
      // Predicated region
      $region13: #{tpu_custom_call.1} parent=11 // pred_check
        %p96 = pneg %p55
      $region14: #{tpu_custom_call.1} parent=11 // pred_check_branch
        %98 = sbr.rel (%p96) target = $region16
      $region15: #{tpu_custom_call.1} parent=11 // pred_region
        _
      $region16: #{tpu_custom_call.1} parent=11 // pred_fallthru
        _
    $region12: #{tpu_custom_call.1} parent=5 // pred_fallthru
      _
    %p99 = scmp.lt.s32.totalorder %s8, 2
    // Predicated region
    $region17: #{tpu_custom_call.1} parent=5 // pred_check
      %p100 = pneg %p99
    $region18: #{tpu_custom_call.1} parent=5 // pred_check_branch
      %102 = sbr.rel (%p100) target = $region20
    $region19: #{tpu_custom_call.1} parent=5 // pred_region
      // Predicated region
      $region21: #{tpu_custom_call.1} parent=19 // pred_check
        %p103 = pneg %p28
      $region22: #{tpu_custom_call.1} parent=19 // pred_check_branch
        %105 = sbr.rel (%p103) target = $region24
      $region23: #{tpu_custom_call.1} parent=19 // pred_region
        %p106 = scmp.lt.s32.totalorder %s8, 1
        %s107 = scalar_select %p106, %s8, 1
        %s108 = smul.addr %s107, 32
        %s109 = smul.addr %s108, 8
        %s110 = scalar_lea.vmem %s0, %s109
      $region24: #{tpu_custom_call.1} parent=19 // pred_fallthru
        _
    $region20: #{tpu_custom_call.1} parent=5 // pred_fallthru
      _
    %p111 = scmp.le.s32.totalorder 1, %s8
    %p112 = scmp.lt.s32.totalorder %s8, 3
    %p113 = pnand %p111, %p112
    %p114 = pneg %p113
    // Predicated region
    $region25: #{tpu_custom_call.1} parent=5 // pred_check
      _
    $region26: #{tpu_custom_call.1} parent=5 // pred_check_branch
      %116 = sbr.rel (%p113) target = $region28
    $region27: #{tpu_custom_call.1} parent=5 // pred_region
      %s117 = ssub.s32 %s8, 1
      %p118 = scmp.lt.s32.totalorder %s13, 1
      %s119 = scalar_select %p118, %s13, 1
      %s120 = smul.addr %s119, 32
      %s121 = smul.addr %s120, 8
      %s122 = scalar_lea.vmem %s0, %s121
      %p123 = pneg %p34
      %p124 = pneg %p31
      %p125 = pneg %p55
      %p126 = pneg %p52
      %p127 = pneg %p81
      %p128 = pneg %p78
      %p129 = scmp.lt.s32.totalorder %s13, 1
      %s130 = scalar_select %p129, %s13, 1
      %s131 = smul.addr %s130, 25
      %s132 = smul.addr %s131, 8
      %s133 = scalar_lea.vmem %s2, %s132
      %p134 = scmp.lt.s32.totalorder %s13, 1
      %s135 = scalar_select %p134, %s13, 1
      %s136 = smul.addr %s135, 32
      %s137 = smul.addr %s136, 8
      %s138 = scalar_lea.vmem %s0, %s137
      %p139 = scmp.lt.s32.totalorder %s13, 1
      %s140 = scalar_select %p139, %s13, 1
      %s141 = smul.addr %s140, 25
      %s142 = smul.addr %s141, 8
      %s143 = scalar_lea.vmem %s2, %s142
      %v144 = vld [vmem:[%s138] sm:$0xff]
      %v145 = vld [vmem:[%s138 + $0x8] sm:$0xff]
      %v146 = vld [vmem:[%s138 + $0x10] sm:$0xff]
      %v147 = vld [vmem:[%s138 + $0x18] sm:$0xff]
      %v148 = vld [vmem:[%s138 + $0x20] sm:$0xff]
      %v149 = vld [vmem:[%s138 + $0x28] sm:$0xff]
      %v150 = vld [vmem:[%s138 + $0x30] sm:$0xff]
      %v151 = vld [vmem:[%s138 + $0x38] sm:$0xff]
      %v152 = vld [vmem:[%s138 + $0x40] sm:$0xff]
      %v153 = vld [vmem:[%s138 + $0x48] sm:$0xff]
      %v154 = vld [vmem:[%s138 + $0x50] sm:$0xff]
      %v155 = vld [vmem:[%s138 + $0x58] sm:$0xff]
      %v156 = vld [vmem:[%s138 + $0x60] sm:$0xff]
      %v157 = vld [vmem:[%s138 + $0x68] sm:$0xff]
      %v158 = vld [vmem:[%s138 + $0x70] sm:$0xff]
      %v159 = vld [vmem:[%s138 + $0x78] sm:$0xff]
      %v160 = vld [vmem:[%s138 + $0x80] sm:$0xff]
      %v161 = vld [vmem:[%s138 + $0x88] sm:$0xff]
      %v162 = vld [vmem:[%s138 + $0x90] sm:$0xff]
      %v163 = vld [vmem:[%s138 + $0x98] sm:$0xff]
      %v164 = vld [vmem:[%s138 + $0xa0] sm:$0xff]
      %v165 = vld [vmem:[%s138 + $0xa8] sm:$0xff]
      %v166 = vld [vmem:[%s138 + $0xb0] sm:$0xff]
      %v167 = vld [vmem:[%s138 + $0xb8] sm:$0xff]
      %v168 = vld [vmem:[%s138 + $0xc0] sm:$0xff]
      %v169 = vld [vmem:[%s138 + $0xc8] sm:$0xff]
      %v170 = vld [vmem:[%s138 + $0xd0] sm:$0xff]
      %v171 = vld [vmem:[%s138 + $0xd8] sm:$0xff]
      %v172 = vld [vmem:[%s138 + $0xe0] sm:$0xff]
      %v173 = vld [vmem:[%s138 + $0xe8] sm:$0xff]
      %v174 = vld [vmem:[%s138 + $0xf0] sm:$0xff]
      %v175 = vld [vmem:[%s138 + $0xf8] sm:$0xff]
      %vm204 = vcmask 1046528
      %v205 = vrot.slane %v144, 1
      %v206 = vrot.slane %v145, 1
      %v207 = vsel %vm204, %v205, %v206
      %v208 = vrot.slane %v146, 1
      %v209 = vrot.slane %v147, 1
      %v210 = vsel %vm204, %v208, %v209
      %v211 = vrot.slane %v148, 1
      %v212 = vrot.slane %v149, 1
      %v213 = vsel %vm204, %v211, %v212
      %v214 = vrot.slane %v150, 1
      %v215 = vrot.slane %v151, 1
      %v216 = vsel %vm204, %v214, %v215
      %v217 = vrot.slane %v152, 1
      %v218 = vrot.slane %v153, 1
      %v219 = vsel %vm204, %v217, %v218
      %v220 = vrot.slane %v154, 1
      %v221 = vrot.slane %v155, 1
      %v222 = vsel %vm204, %v220, %v221
      %v223 = vrot.slane %v156, 1
      %v224 = vrot.slane %v157, 1
      %v225 = vsel %vm204, %v223, %v224
      %v226 = vrot.slane %v158, 1
      %v227 = vrot.slane %v159, 1
      %v228 = vsel %vm204, %v226, %v227
      %v229 = vrot.slane %v160, 1
      %v230 = vrot.slane %v161, 1
      %v231 = vsel %vm204, %v229, %v230
      %v232 = vrot.slane %v162, 1
      %v233 = vrot.slane %v163, 1
      %v234 = vsel %vm204, %v232, %v233
      %v235 = vrot.slane %v164, 1
      %v236 = vrot.slane %v165, 1
      %v237 = vsel %vm204, %v235, %v236
      %v238 = vrot.slane %v166, 1
      %v239 = vrot.slane %v167, 1
      %v240 = vsel %vm204, %v238, %v239
      %v241 = vrot.slane %v168, 1
      %v242 = vrot.slane %v169, 1
      %v243 = vsel %vm204, %v241, %v242
      %v244 = vrot.slane %v170, 1
      %v245 = vrot.slane %v171, 1
      %v246 = vsel %vm204, %v244, %v245
      %247 = vrot.lane.b32.xlu0 %v207, 4
      %v248 = vpop.permute.xlu0 %247
      %249 = vrot.lane.b32.xlu0 %v206, 4
      %v250 = vpop.permute.xlu0 %249
      %251 = vrot.lane.b32.xlu0 %v210, 4
      %v252 = vpop.permute.xlu0 %251
      %253 = vrot.lane.b32.xlu0 %v209, 4
      %v254 = vpop.permute.xlu0 %253
      %255 = vrot.lane.b32.xlu0 %v213, 4
      %v256 = vpop.permute.xlu0 %255
      %257 = vrot.lane.b32.xlu0 %v212, 4
      %v258 = vpop.permute.xlu0 %257
      %259 = vrot.lane.b32.xlu0 %v216, 4
      %v260 = vpop.permute.xlu0 %259
      %261 = vrot.lane.b32.xlu0 %v215, 4
      %v262 = vpop.permute.xlu0 %261
      %263 = vrot.lane.b32.xlu0 %v219, 4
      %v264 = vpop.permute.xlu0 %263
      %265 = vrot.lane.b32.xlu0 %v218, 4
      %v266 = vpop.permute.xlu0 %265
      %267 = vrot.lane.b32.xlu0 %v222, 4
      %v268 = vpop.permute.xlu0 %267
      %269 = vrot.lane.b32.xlu0 %v221, 4
      %v270 = vpop.permute.xlu0 %269
      %271 = vrot.lane.b32.xlu0 %v225, 4
      %v272 = vpop.permute.xlu0 %271
      %273 = vrot.lane.b32.xlu0 %v224, 4
      %v274 = vpop.permute.xlu0 %273
      %275 = vrot.lane.b32.xlu0 %v228, 4
      %v276 = vpop.permute.xlu0 %275
      %277 = vrot.lane.b32.xlu0 %v227, 4
      %v278 = vpop.permute.xlu0 %277
      %279 = vrot.lane.b32.xlu0 %v231, 4
      %v280 = vpop.permute.xlu0 %279
      %281 = vrot.lane.b32.xlu0 %v230, 4
      %v282 = vpop.permute.xlu0 %281
      %283 = vrot.lane.b32.xlu0 %v234, 4
      %v284 = vpop.permute.xlu0 %283
      %285 = vrot.lane.b32.xlu0 %v233, 4
      %v286 = vpop.permute.xlu0 %285
      %287 = vrot.lane.b32.xlu0 %v237, 4
      %v288 = vpop.permute.xlu0 %287
      %289 = vrot.lane.b32.xlu0 %v236, 4
      %v290 = vpop.permute.xlu0 %289
      %291 = vrot.lane.b32.xlu0 %v240, 4
      %v292 = vpop.permute.xlu0 %291
      %293 = vrot.lane.b32.xlu0 %v239, 4
      %v294 = vpop.permute.xlu0 %293
      %295 = vrot.lane.b32.xlu0 %v243, 4
      %v296 = vpop.permute.xlu0 %295
      %297 = vrot.lane.b32.xlu0 %v242, 4
      %v298 = vpop.permute.xlu0 %297
      %299 = vrot.lane.b32.xlu0 %v246, 4
      %v300 = vpop.permute.xlu0 %299
      %301 = vrot.lane.b32.xlu0 %v245, 4
      %v302 = vpop.permute.xlu0 %301
      %vm331 = vcmask 1045504
      %v332 = vrot.slane %v144, 2
      %v333 = vrot.slane %v145, 2
      %v334 = vsel %vm331, %v332, %v333
      %v335 = vrot.slane %v146, 2
      %v336 = vrot.slane %v147, 2
      %v337 = vsel %vm331, %v335, %v336
      %v338 = vrot.slane %v148, 2
      %v339 = vrot.slane %v149, 2
      %v340 = vsel %vm331, %v338, %v339
      %v341 = vrot.slane %v150, 2
      %v342 = vrot.slane %v151, 2
      %v343 = vsel %vm331, %v341, %v342
      %v344 = vrot.slane %v152, 2
      %v345 = vrot.slane %v153, 2
      %v346 = vsel %vm331, %v344, %v345
      %v347 = vrot.slane %v154, 2
      %v348 = vrot.slane %v155, 2
      %v349 = vsel %vm331, %v347, %v348
      %v350 = vrot.slane %v156, 2
      %v351 = vrot.slane %v157, 2
      %v352 = vsel %vm331, %v350, %v351
      %v353 = vrot.slane %v158, 2
      %v354 = vrot.slane %v159, 2
      %v355 = vsel %vm331, %v353, %v354
      %v356 = vrot.slane %v160, 2
      %v357 = vrot.slane %v161, 2
      %v358 = vsel %vm331, %v356, %v357
      %v359 = vrot.slane %v162, 2
      %v360 = vrot.slane %v163, 2
      %v361 = vsel %vm331, %v359, %v360
      %v362 = vrot.slane %v164, 2
      %v363 = vrot.slane %v165, 2
      %v364 = vsel %vm331, %v362, %v363
      %v365 = vrot.slane %v166, 2
      %v366 = vrot.slane %v167, 2
      %v367 = vsel %vm331, %v365, %v366
      %v368 = vrot.slane %v168, 2
      %v369 = vrot.slane %v169, 2
      %v370 = vsel %vm331, %v368, %v369
      %v371 = vrot.slane %v170, 2
      %v372 = vrot.slane %v171, 2
      %v373 = vsel %vm331, %v371, %v372
      %374 = vrot.lane.b32.xlu0 %v334, 8
      %v375 = vpop.permute.xlu0 %374
      %376 = vrot.lane.b32.xlu0 %v333, 8
      %v377 = vpop.permute.xlu0 %376
      %378 = vrot.lane.b32.xlu0 %v337, 8
      %v379 = vpop.permute.xlu0 %378
      %380 = vrot.lane.b32.xlu0 %v336, 8
      %v381 = vpop.permute.xlu0 %380
      %382 = vrot.lane.b32.xlu0 %v340, 8
      %v383 = vpop.permute.xlu0 %382
      %384 = vrot.lane.b32.xlu0 %v339, 8
      %v385 = vpop.permute.xlu0 %384
      %386 = vrot.lane.b32.xlu0 %v343, 8
      %v387 = vpop.permute.xlu0 %386
      %388 = vrot.lane.b32.xlu0 %v342, 8
      %v389 = vpop.permute.xlu0 %388
      %390 = vrot.lane.b32.xlu0 %v346, 8
      %v391 = vpop.permute.xlu0 %390
      %392 = vrot.lane.b32.xlu0 %v345, 8
      %v393 = vpop.permute.xlu0 %392
      %394 = vrot.lane.b32.xlu0 %v349, 8
      %v395 = vpop.permute.xlu0 %394
      %396 = vrot.lane.b32.xlu0 %v348, 8
      %v397 = vpop.permute.xlu0 %396
      %398 = vrot.lane.b32.xlu0 %v352, 8
      %v399 = vpop.permute.xlu0 %398
      %400 = vrot.lane.b32.xlu0 %v351, 8
      %v401 = vpop.permute.xlu0 %400
      %402 = vrot.lane.b32.xlu0 %v355, 8
      %v403 = vpop.permute.xlu0 %402
      %404 = vrot.lane.b32.xlu0 %v354, 8
      %v405 = vpop.permute.xlu0 %404
      %406 = vrot.lane.b32.xlu0 %v358, 8
      %v407 = vpop.permute.xlu0 %406
      %408 = vrot.lane.b32.xlu0 %v357, 8
      %v409 = vpop.permute.xlu0 %408
      %410 = vrot.lane.b32.xlu0 %v361, 8
      %v411 = vpop.permute.xlu0 %410
      %412 = vrot.lane.b32.xlu0 %v360, 8
      %v413 = vpop.permute.xlu0 %412
      %414 = vrot.lane.b32.xlu0 %v364, 8
      %v415 = vpop.permute.xlu0 %414
      %416 = vrot.lane.b32.xlu0 %v363, 8
      %v417 = vpop.permute.xlu0 %416
      %418 = vrot.lane.b32.xlu0 %v367, 8
      %v419 = vpop.permute.xlu0 %418
      %420 = vrot.lane.b32.xlu0 %v366, 8
      %v421 = vpop.permute.xlu0 %420
      %422 = vrot.lane.b32.xlu0 %v370, 8
      %v423 = vpop.permute.xlu0 %422
      %424 = vrot.lane.b32.xlu0 %v369, 8
      %v425 = vpop.permute.xlu0 %424
      %426 = vrot.lane.b32.xlu0 %v373, 8
      %v427 = vpop.permute.xlu0 %426
      %428 = vrot.lane.b32.xlu0 %v372, 8
      %v429 = vpop.permute.xlu0 %428
      %460 = vrot.lane.b32.xlu0 %v146, 12
      %v461 = vpop.permute.xlu0 %460
      %462 = vrot.lane.b32.xlu0 %v147, 12
      %v463 = vpop.permute.xlu0 %462
      %464 = vrot.lane.b32.xlu0 %v148, 12
      %v465 = vpop.permute.xlu0 %464
      %466 = vrot.lane.b32.xlu0 %v149, 12
      %v467 = vpop.permute.xlu0 %466
      %468 = vrot.lane.b32.xlu0 %v150, 12
      %v469 = vpop.permute.xlu0 %468
      %470 = vrot.lane.b32.xlu0 %v151, 12
      %v471 = vpop.permute.xlu0 %470
      %472 = vrot.lane.b32.xlu0 %v152, 12
      %v473 = vpop.permute.xlu0 %472
      %474 = vrot.lane.b32.xlu0 %v153, 12
      %v475 = vpop.permute.xlu0 %474
      %476 = vrot.lane.b32.xlu0 %v154, 12
      %v477 = vpop.permute.xlu0 %476
      %478 = vrot.lane.b32.xlu0 %v155, 12
      %v479 = vpop.permute.xlu0 %478
      %480 = vrot.lane.b32.xlu0 %v156, 12
      %v481 = vpop.permute.xlu0 %480
      %482 = vrot.lane.b32.xlu0 %v157, 12
      %v483 = vpop.permute.xlu0 %482
      %484 = vrot.lane.b32.xlu0 %v158, 12
      %v485 = vpop.permute.xlu0 %484
      %486 = vrot.lane.b32.xlu0 %v159, 12
      %v487 = vpop.permute.xlu0 %486
      %488 = vrot.lane.b32.xlu0 %v160, 12
      %v489 = vpop.permute.xlu0 %488
      %490 = vrot.lane.b32.xlu0 %v161, 12
      %v491 = vpop.permute.xlu0 %490
      %492 = vrot.lane.b32.xlu0 %v162, 12
      %v493 = vpop.permute.xlu0 %492
      %494 = vrot.lane.b32.xlu0 %v163, 12
      %v495 = vpop.permute.xlu0 %494
      %496 = vrot.lane.b32.xlu0 %v164, 12
      %v497 = vpop.permute.xlu0 %496
      %498 = vrot.lane.b32.xlu0 %v165, 12
      %v499 = vpop.permute.xlu0 %498
      %500 = vrot.lane.b32.xlu0 %v166, 12
      %v501 = vpop.permute.xlu0 %500
      %502 = vrot.lane.b32.xlu0 %v167, 12
      %v503 = vpop.permute.xlu0 %502
      %504 = vrot.lane.b32.xlu0 %v168, 12
      %v505 = vpop.permute.xlu0 %504
      %506 = vrot.lane.b32.xlu0 %v169, 12
      %v507 = vpop.permute.xlu0 %506
      %508 = vrot.lane.b32.xlu0 %v170, 12
      %v509 = vpop.permute.xlu0 %508
      %510 = vrot.lane.b32.xlu0 %v171, 12
      %v511 = vpop.permute.xlu0 %510
      %512 = vrot.lane.b32.xlu0 %v172, 12
      %v513 = vpop.permute.xlu0 %512
      %514 = vrot.lane.b32.xlu0 %v173, 12
      %v515 = vpop.permute.xlu0 %514
      %v544 = vrot.slane %v172, 1
      %v545 = vrot.slane %v173, 1
      %v546 = vsel %vm204, %v544, %v545
      %547 = vrot.lane.b32.xlu0 %v210, 16
      %v548 = vpop.permute.xlu0 %547
      %549 = vrot.lane.b32.xlu0 %v209, 16
      %v550 = vpop.permute.xlu0 %549
      %551 = vrot.lane.b32.xlu0 %v213, 16
      %v552 = vpop.permute.xlu0 %551
      %553 = vrot.lane.b32.xlu0 %v212, 16
      %v554 = vpop.permute.xlu0 %553
      %555 = vrot.lane.b32.xlu0 %v216, 16
      %v556 = vpop.permute.xlu0 %555
      %557 = vrot.lane.b32.xlu0 %v215, 16
      %v558 = vpop.permute.xlu0 %557
      %559 = vrot.lane.b32.xlu0 %v219, 16
      %v560 = vpop.permute.xlu0 %559
      %561 = vrot.lane.b32.xlu0 %v218, 16
      %v562 = vpop.permute.xlu0 %561
      %563 = vrot.lane.b32.xlu0 %v222, 16
      %v564 = vpop.permute.xlu0 %563
      %565 = vrot.lane.b32.xlu0 %v221, 16
      %v566 = vpop.permute.xlu0 %565
      %567 = vrot.lane.b32.xlu0 %v225, 16
      %v568 = vpop.permute.xlu0 %567
      %569 = vrot.lane.b32.xlu0 %v224, 16
      %v570 = vpop.permute.xlu0 %569
      %571 = vrot.lane.b32.xlu0 %v228, 16
      %v572 = vpop.permute.xlu0 %571
      %573 = vrot.lane.b32.xlu0 %v227, 16
      %v574 = vpop.permute.xlu0 %573
      %575 = vrot.lane.b32.xlu0 %v231, 16
      %v576 = vpop.permute.xlu0 %575
      %577 = vrot.lane.b32.xlu0 %v230, 16
      %v578 = vpop.permute.xlu0 %577
      %579 = vrot.lane.b32.xlu0 %v234, 16
      %v580 = vpop.permute.xlu0 %579
      %581 = vrot.lane.b32.xlu0 %v233, 16
      %v582 = vpop.permute.xlu0 %581
      %583 = vrot.lane.b32.xlu0 %v237, 16
      %v584 = vpop.permute.xlu0 %583
      %585 = vrot.lane.b32.xlu0 %v236, 16
      %v586 = vpop.permute.xlu0 %585
      %587 = vrot.lane.b32.xlu0 %v240, 16
      %v588 = vpop.permute.xlu0 %587
      %589 = vrot.lane.b32.xlu0 %v239, 16
      %v590 = vpop.permute.xlu0 %589
      %591 = vrot.lane.b32.xlu0 %v243, 16
      %v592 = vpop.permute.xlu0 %591
      %593 = vrot.lane.b32.xlu0 %v242, 16
      %v594 = vpop.permute.xlu0 %593
      %595 = vrot.lane.b32.xlu0 %v246, 16
      %v596 = vpop.permute.xlu0 %595
      %597 = vrot.lane.b32.xlu0 %v245, 16
      %v598 = vpop.permute.xlu0 %597
      %599 = vrot.lane.b32.xlu0 %v546, 16
      %v600 = vpop.permute.xlu0 %599
      %601 = vrot.lane.b32.xlu0 %v545, 16
      %v602 = vpop.permute.xlu0 %601
      %v631 = vrot.slane %v172, 2
      %v632 = vrot.slane %v173, 2
      %v633 = vsel %vm331, %v631, %v632
      %634 = vrot.lane.b32.xlu0 %v337, 20
      %v635 = vpop.permute.xlu0 %634
      %636 = vrot.lane.b32.xlu0 %v336, 20
      %v637 = vpop.permute.xlu0 %636
      %638 = vrot.lane.b32.xlu0 %v340, 20
      %v639 = vpop.permute.xlu0 %638
      %640 = vrot.lane.b32.xlu0 %v339, 20
      %v641 = vpop.permute.xlu0 %640
      %642 = vrot.lane.b32.xlu0 %v343, 20
      %v643 = vpop.permute.xlu0 %642
      %644 = vrot.lane.b32.xlu0 %v342, 20
      %v645 = vpop.permute.xlu0 %644
      %646 = vrot.lane.b32.xlu0 %v346, 20
      %v647 = vpop.permute.xlu0 %646
      %648 = vrot.lane.b32.xlu0 %v345, 20
      %v649 = vpop.permute.xlu0 %648
      %650 = vrot.lane.b32.xlu0 %v349, 20
      %v651 = vpop.permute.xlu0 %650
      %652 = vrot.lane.b32.xlu0 %v348, 20
      %v653 = vpop.permute.xlu0 %652
      %654 = vrot.lane.b32.xlu0 %v352, 20
      %v655 = vpop.permute.xlu0 %654
      %656 = vrot.lane.b32.xlu0 %v351, 20
      %v657 = vpop.permute.xlu0 %656
      %658 = vrot.lane.b32.xlu0 %v355, 20
      %v659 = vpop.permute.xlu0 %658
      %660 = vrot.lane.b32.xlu0 %v354, 20
      %v661 = vpop.permute.xlu0 %660
      %662 = vrot.lane.b32.xlu0 %v358, 20
      %v663 = vpop.permute.xlu0 %662
      %664 = vrot.lane.b32.xlu0 %v357, 20
      %v665 = vpop.permute.xlu0 %664
      %666 = vrot.lane.b32.xlu0 %v361, 20
      %v667 = vpop.permute.xlu0 %666
      %668 = vrot.lane.b32.xlu0 %v360, 20
      %v669 = vpop.permute.xlu0 %668
      %670 = vrot.lane.b32.xlu0 %v364, 20
      %v671 = vpop.permute.xlu0 %670
      %672 = vrot.lane.b32.xlu0 %v363, 20
      %v673 = vpop.permute.xlu0 %672
      %674 = vrot.lane.b32.xlu0 %v367, 20
      %v675 = vpop.permute.xlu0 %674
      %676 = vrot.lane.b32.xlu0 %v366, 20
      %v677 = vpop.permute.xlu0 %676
      %678 = vrot.lane.b32.xlu0 %v370, 20
      %v679 = vpop.permute.xlu0 %678
      %680 = vrot.lane.b32.xlu0 %v369, 20
      %v681 = vpop.permute.xlu0 %680
      %682 = vrot.lane.b32.xlu0 %v373, 20
      %v683 = vpop.permute.xlu0 %682
      %684 = vrot.lane.b32.xlu0 %v372, 20
      %v685 = vpop.permute.xlu0 %684
      %686 = vrot.lane.b32.xlu0 %v633, 20
      %v687 = vpop.permute.xlu0 %686
      %688 = vrot.lane.b32.xlu0 %v632, 20
      %v689 = vpop.permute.xlu0 %688
      %720 = vrot.lane.b32.xlu0 %v148, 24
      %v721 = vpop.permute.xlu0 %720
      %722 = vrot.lane.b32.xlu0 %v149, 24
      %v723 = vpop.permute.xlu0 %722
      %724 = vrot.lane.b32.xlu0 %v150, 24
      %v725 = vpop.permute.xlu0 %724
      %726 = vrot.lane.b32.xlu0 %v151, 24
      %v727 = vpop.permute.xlu0 %726
      %728 = vrot.lane.b32.xlu0 %v152, 24
      %v729 = vpop.permute.xlu0 %728
      %730 = vrot.lane.b32.xlu0 %v153, 24
      %v731 = vpop.permute.xlu0 %730
      %732 = vrot.lane.b32.xlu0 %v154, 24
      %v733 = vpop.permute.xlu0 %732
      %734 = vrot.lane.b32.xlu0 %v155, 24
      %v735 = vpop.permute.xlu0 %734
      %736 = vrot.lane.b32.xlu0 %v156, 24
      %v737 = vpop.permute.xlu0 %736
      %738 = vrot.lane.b32.xlu0 %v157, 24
      %v739 = vpop.permute.xlu0 %738
      %740 = vrot.lane.b32.xlu0 %v158, 24
      %v741 = vpop.permute.xlu0 %740
      %742 = vrot.lane.b32.xlu0 %v159, 24
      %v743 = vpop.permute.xlu0 %742
      %744 = vrot.lane.b32.xlu0 %v160, 24
      %v745 = vpop.permute.xlu0 %744
      %746 = vrot.lane.b32.xlu0 %v161, 24
      %v747 = vpop.permute.xlu0 %746
      %748 = vrot.lane.b32.xlu0 %v162, 24
      %v749 = vpop.permute.xlu0 %748
      %750 = vrot.lane.b32.xlu0 %v163, 24
      %v751 = vpop.permute.xlu0 %750
      %752 = vrot.lane.b32.xlu0 %v164, 24
      %v753 = vpop.permute.xlu0 %752
      %754 = vrot.lane.b32.xlu0 %v165, 24
      %v755 = vpop.permute.xlu0 %754
      %756 = vrot.lane.b32.xlu0 %v166, 24
      %v757 = vpop.permute.xlu0 %756
      %758 = vrot.lane.b32.xlu0 %v167, 24
      %v759 = vpop.permute.xlu0 %758
      %760 = vrot.lane.b32.xlu0 %v168, 24
      %v761 = vpop.permute.xlu0 %760
      %762 = vrot.lane.b32.xlu0 %v169, 24
      %v763 = vpop.permute.xlu0 %762
      %764 = vrot.lane.b32.xlu0 %v170, 24
      %v765 = vpop.permute.xlu0 %764
      %766 = vrot.lane.b32.xlu0 %v171, 24
      %v767 = vpop.permute.xlu0 %766
      %768 = vrot.lane.b32.xlu0 %v172, 24
      %v769 = vpop.permute.xlu0 %768
      %770 = vrot.lane.b32.xlu0 %v173, 24
      %v771 = vpop.permute.xlu0 %770
      %772 = vrot.lane.b32.xlu0 %v174, 24
      %v773 = vpop.permute.xlu0 %772
      %774 = vrot.lane.b32.xlu0 %v175, 24
      %v775 = vpop.permute.xlu0 %774
      %v804 = vrot.slane %v174, 1
      %v805 = vrot.slane %v175, 1
      %v806 = vsel %vm204, %v804, %v805
      %807 = vrot.lane.b32.xlu0 %v213, 28
      %v808 = vpop.permute.xlu0 %807
      %809 = vrot.lane.b32.xlu0 %v212, 28
      %v810 = vpop.permute.xlu0 %809
      %811 = vrot.lane.b32.xlu0 %v216, 28
      %v812 = vpop.permute.xlu0 %811
      %813 = vrot.lane.b32.xlu0 %v215, 28
      %v814 = vpop.permute.xlu0 %813
      %815 = vrot.lane.b32.xlu0 %v219, 28
      %v816 = vpop.permute.xlu0 %815
      %817 = vrot.lane.b32.xlu0 %v218, 28
      %v818 = vpop.permute.xlu0 %817
      %819 = vrot.lane.b32.xlu0 %v222, 28
      %v820 = vpop.permute.xlu0 %819
      %821 = vrot.lane.b32.xlu0 %v221, 28
      %v822 = vpop.permute.xlu0 %821
      %823 = vrot.lane.b32.xlu0 %v225, 28
      %v824 = vpop.permute.xlu0 %823
      %825 = vrot.lane.b32.xlu0 %v224, 28
      %v826 = vpop.permute.xlu0 %825
      %827 = vrot.lane.b32.xlu0 %v228, 28
      %v828 = vpop.permute.xlu0 %827
      %829 = vrot.lane.b32.xlu0 %v227, 28
      %v830 = vpop.permute.xlu0 %829
      %831 = vrot.lane.b32.xlu0 %v231, 28
      %v832 = vpop.permute.xlu0 %831
      %833 = vrot.lane.b32.xlu0 %v230, 28
      %v834 = vpop.permute.xlu0 %833
      %835 = vrot.lane.b32.xlu0 %v234, 28
      %v836 = vpop.permute.xlu0 %835
      %837 = vrot.lane.b32.xlu0 %v233, 28
      %v838 = vpop.permute.xlu0 %837
      %839 = vrot.lane.b32.xlu0 %v237, 28
      %v840 = vpop.permute.xlu0 %839
      %841 = vrot.lane.b32.xlu0 %v236, 28
      %v842 = vpop.permute.xlu0 %841
      %843 = vrot.lane.b32.xlu0 %v240, 28
      %v844 = vpop.permute.xlu0 %843
      %845 = vrot.lane.b32.xlu0 %v239, 28
      %v846 = vpop.permute.xlu0 %845
      %847 = vrot.lane.b32.xlu0 %v243, 28
      %v848 = vpop.permute.xlu0 %847
      %849 = vrot.lane.b32.xlu0 %v242, 28
      %v850 = vpop.permute.xlu0 %849
      %851 = vrot.lane.b32.xlu0 %v246, 28
      %v852 = vpop.permute.xlu0 %851
      %853 = vrot.lane.b32.xlu0 %v245, 28
      %v854 = vpop.permute.xlu0 %853
      %855 = vrot.lane.b32.xlu0 %v546, 28
      %v856 = vpop.permute.xlu0 %855
      %857 = vrot.lane.b32.xlu0 %v545, 28
      %v858 = vpop.permute.xlu0 %857
      %859 = vrot.lane.b32.xlu0 %v806, 28
      %v860 = vpop.permute.xlu0 %859
      %861 = vrot.lane.b32.xlu0 %v805, 28
      %v862 = vpop.permute.xlu0 %861
      %v891 = vrot.slane %v174, 2
      %v892 = vrot.slane %v175, 2
      %v893 = vsel %vm331, %v891, %v892
      %894 = vrot.lane.b32.xlu0 %v340, 32
      %v895 = vpop.permute.xlu0 %894
      %896 = vrot.lane.b32.xlu0 %v339, 32
      %v897 = vpop.permute.xlu0 %896
      %898 = vrot.lane.b32.xlu0 %v343, 32
      %v899 = vpop.permute.xlu0 %898
      %900 = vrot.lane.b32.xlu0 %v342, 32
      %v901 = vpop.permute.xlu0 %900
      %902 = vrot.lane.b32.xlu0 %v346, 32
      %v903 = vpop.permute.xlu0 %902
      %904 = vrot.lane.b32.xlu0 %v345, 32
      %v905 = vpop.permute.xlu0 %904
      %906 = vrot.lane.b32.xlu0 %v349, 32
      %v907 = vpop.permute.xlu0 %906
      %908 = vrot.lane.b32.xlu0 %v348, 32
      %v909 = vpop.permute.xlu0 %908
      %910 = vrot.lane.b32.xlu0 %v352, 32
      %v911 = vpop.permute.xlu0 %910
      %912 = vrot.lane.b32.xlu0 %v351, 32
      %v913 = vpop.permute.xlu0 %912
      %914 = vrot.lane.b32.xlu0 %v355, 32
      %v915 = vpop.permute.xlu0 %914
      %916 = vrot.lane.b32.xlu0 %v354, 32
      %v917 = vpop.permute.xlu0 %916
      %918 = vrot.lane.b32.xlu0 %v358, 32
      %v919 = vpop.permute.xlu0 %918
      %920 = vrot.lane.b32.xlu0 %v357, 32
      %v921 = vpop.permute.xlu0 %920
      %922 = vrot.lane.b32.xlu0 %v361, 32
      %v923 = vpop.permute.xlu0 %922
      %924 = vrot.lane.b32.xlu0 %v360, 32
      %v925 = vpop.permute.xlu0 %924
      %926 = vrot.lane.b32.xlu0 %v364, 32
      %v927 = vpop.permute.xlu0 %926
      %928 = vrot.lane.b32.xlu0 %v363, 32
      %v929 = vpop.permute.xlu0 %928
      %930 = vrot.lane.b32.xlu0 %v367, 32
      %v931 = vpop.permute.xlu0 %930
      %932 = vrot.lane.b32.xlu0 %v366, 32
      %v933 = vpop.permute.xlu0 %932
      %934 = vrot.lane.b32.xlu0 %v370, 32
      %v935 = vpop.permute.xlu0 %934
      %936 = vrot.lane.b32.xlu0 %v369, 32
      %v937 = vpop.permute.xlu0 %936
      %938 = vrot.lane.b32.xlu0 %v373, 32
      %v939 = vpop.permute.xlu0 %938
      %940 = vrot.lane.b32.xlu0 %v372, 32
      %v941 = vpop.permute.xlu0 %940
      %942 = vrot.lane.b32.xlu0 %v633, 32
      %v943 = vpop.permute.xlu0 %942
      %944 = vrot.lane.b32.xlu0 %v632, 32
      %v945 = vpop.permute.xlu0 %944
      %946 = vrot.lane.b32.xlu0 %v893, 32
      %v947 = vpop.permute.xlu0 %946
      %948 = vrot.lane.b32.xlu0 %v892, 32
      %v949 = vpop.permute.xlu0 %948
      %vm978 = vcmask 31744
      %v979 = vsel %vm978, %v144, %v248
      %v980 = vsel %vm978, %v145, %v250
      %v981 = vsel %vm978, %v146, %v252
      %v982 = vsel %vm978, %v147, %v254
      %v983 = vsel %vm978, %v148, %v256
      %v984 = vsel %vm978, %v149, %v258
      %v985 = vsel %vm978, %v150, %v260
      %v986 = vsel %vm978, %v151, %v262
      %v987 = vsel %vm978, %v152, %v264
      %v988 = vsel %vm978, %v153, %v266
      %v989 = vsel %vm978, %v154, %v268
      %v990 = vsel %vm978, %v155, %v270
      %v991 = vsel %vm978, %v156, %v272
      %v992 = vsel %vm978, %v157, %v274
      %v993 = vsel %vm978, %v158, %v276
      %v994 = vsel %vm978, %v159, %v278
      %v995 = vsel %vm978, %v160, %v280
      %v996 = vsel %vm978, %v161, %v282
      %v997 = vsel %vm978, %v162, %v284
      %v998 = vsel %vm978, %v163, %v286
      %v999 = vsel %vm978, %v164, %v288
      %v1000 = vsel %vm978, %v165, %v290
      %v1001 = vsel %vm978, %v166, %v292
      %v1002 = vsel %vm978, %v167, %v294
      %v1003 = vsel %vm978, %v168, %v296
      %v1004 = vsel %vm978, %v169, %v298
      %v1005 = vsel %vm978, %v170, %v300
      %v1006 = vsel %vm978, %v171, %v302
      %vm1007 = vcmask 64512
      %v1008 = vsel %vm1007, %v979, %v375
      %v1009 = vsel %vm1007, %v980, %v377
      %v1010 = vsel %vm1007, %v981, %v379
      %v1011 = vsel %vm1007, %v982, %v381
      %v1012 = vsel %vm1007, %v983, %v383
      %v1013 = vsel %vm1007, %v984, %v385
      %v1014 = vsel %vm1007, %v985, %v387
      %v1015 = vsel %vm1007, %v986, %v389
      %v1016 = vsel %vm1007, %v987, %v391
      %v1017 = vsel %vm1007, %v988, %v393
      %v1018 = vsel %vm1007, %v989, %v395
      %v1019 = vsel %vm1007, %v990, %v397
      %v1020 = vsel %vm1007, %v991, %v399
      %v1021 = vsel %vm1007, %v992, %v401
      %v1022 = vsel %vm1007, %v993, %v403
      %v1023 = vsel %vm1007, %v994, %v405
      %v1024 = vsel %vm1007, %v995, %v407
      %v1025 = vsel %vm1007, %v996, %v409
      %v1026 = vsel %vm1007, %v997, %v411
      %v1027 = vsel %vm1007, %v998, %v413
      %v1028 = vsel %vm1007, %v999, %v415
      %v1029 = vsel %vm1007, %v1000, %v417
      %v1030 = vsel %vm1007, %v1001, %v419
      %v1031 = vsel %vm1007, %v1002, %v421
      %v1032 = vsel %vm1007, %v1003, %v423
      %v1033 = vsel %vm1007, %v1004, %v425
      %v1034 = vsel %vm1007, %v1005, %v427
      %v1035 = vsel %vm1007, %v1006, %v429
      %vm1036 = vcmask 97280
      %v1037 = vsel %vm1036, %v1008, %v461
      %v1038 = vsel %vm1036, %v1009, %v463
      %v1039 = vsel %vm1036, %v1010, %v465
      %v1040 = vsel %vm1036, %v1011, %v467
      %v1041 = vsel %vm1036, %v1012, %v469
      %v1042 = vsel %vm1036, %v1013, %v471
      %v1043 = vsel %vm1036, %v1014, %v473
      %v1044 = vsel %vm1036, %v1015, %v475
      %v1045 = vsel %vm1036, %v1016, %v477
      %v1046 = vsel %vm1036, %v1017, %v479
      %v1047 = vsel %vm1036, %v1018, %v481
      %v1048 = vsel %vm1036, %v1019, %v483
      %v1049 = vsel %vm1036, %v1020, %v485
      %v1050 = vsel %vm1036, %v1021, %v487
      %v1051 = vsel %vm1036, %v1022, %v489
      %v1052 = vsel %vm1036, %v1023, %v491
      %v1053 = vsel %vm1036, %v1024, %v493
      %v1054 = vsel %vm1036, %v1025, %v495
      %v1055 = vsel %vm1036, %v1026, %v497
      %v1056 = vsel %vm1036, %v1027, %v499
      %v1057 = vsel %vm1036, %v1028, %v501
      %v1058 = vsel %vm1036, %v1029, %v503
      %v1059 = vsel %vm1036, %v1030, %v505
      %v1060 = vsel %vm1036, %v1031, %v507
      %v1061 = vsel %vm1036, %v1032, %v509
      %v1062 = vsel %vm1036, %v1033, %v511
      %v1063 = vsel %vm1036, %v1034, %v513
      %v1064 = vsel %vm1036, %v1035, %v515
      %vm1065 = vcmask 130048
      %v1066 = vsel %vm1065, %v1037, %v548
      %v1067 = vsel %vm1065, %v1038, %v550
      %v1068 = vsel %vm1065, %v1039, %v552
      %v1069 = vsel %vm1065, %v1040, %v554
      %v1070 = vsel %vm1065, %v1041, %v556
      %v1071 = vsel %vm1065, %v1042, %v558
      %v1072 = vsel %vm1065, %v1043, %v560
      %v1073 = vsel %vm1065, %v1044, %v562
      %v1074 = vsel %vm1065, %v1045, %v564
      %v1075 = vsel %vm1065, %v1046, %v566
      %v1076 = vsel %vm1065, %v1047, %v568
      %v1077 = vsel %vm1065, %v1048, %v570
      %v1078 = vsel %vm1065, %v1049, %v572
      %v1079 = vsel %vm1065, %v1050, %v574
      %v1080 = vsel %vm1065, %v1051, %v576
      %v1081 = vsel %vm1065, %v1052, %v578
      %v1082 = vsel %vm1065, %v1053, %v580
      %v1083 = vsel %vm1065, %v1054, %v582
      %v1084 = vsel %vm1065, %v1055, %v584
      %v1085 = vsel %vm1065, %v1056, %v586
      %v1086 = vsel %vm1065, %v1057, %v588
      %v1087 = vsel %vm1065, %v1058, %v590
      %v1088 = vsel %vm1065, %v1059, %v592
      %v1089 = vsel %vm1065, %v1060, %v594
      %v1090 = vsel %vm1065, %v1061, %v596
      %v1091 = vsel %vm1065, %v1062, %v598
      %v1092 = vsel %vm1065, %v1063, %v600
      %v1093 = vsel %vm1065, %v1064, %v602
      %vm1094 = vcmask 162816
      %v1095 = vsel %vm1094, %v1066, %v635
      %v1096 = vsel %vm1094, %v1067, %v637
      %v1097 = vsel %vm1094, %v1068, %v639
      %v1098 = vsel %vm1094, %v1069, %v641
      %v1099 = vsel %vm1094, %v1070, %v643
      %v1100 = vsel %vm1094, %v1071, %v645
      %v1101 = vsel %vm1094, %v1072, %v647
      %v1102 = vsel %vm1094, %v1073, %v649
      %v1103 = vsel %vm1094, %v1074, %v651
      %v1104 = vsel %vm1094, %v1075, %v653
      %v1105 = vsel %vm1094, %v1076, %v655
      %v1106 = vsel %vm1094, %v1077, %v657
      %v1107 = vsel %vm1094, %v1078, %v659
      %v1108 = vsel %vm1094, %v1079, %v661
      %v1109 = vsel %vm1094, %v1080, %v663
      %v1110 = vsel %vm1094, %v1081, %v665
      %v1111 = vsel %vm1094, %v1082, %v667
      %v1112 = vsel %vm1094, %v1083, %v669
      %v1113 = vsel %vm1094, %v1084, %v671
      %v1114 = vsel %vm1094, %v1085, %v673
      %v1115 = vsel %vm1094, %v1086, %v675
      %v1116 = vsel %vm1094, %v1087, %v677
      %v1117 = vsel %vm1094, %v1088, %v679
      %v1118 = vsel %vm1094, %v1089, %v681
      %v1119 = vsel %vm1094, %v1090, %v683
      %v1120 = vsel %vm1094, %v1091, %v685
      %v1121 = vsel %vm1094, %v1092, %v687
      %v1122 = vsel %vm1094, %v1093, %v689
      %vm1123 = vcmask 195584
      %v1124 = vsel %vm1123, %v1095, %v721
      %v1125 = vsel %vm1123, %v1096, %v723
      %v1126 = vsel %vm1123, %v1097, %v725
      %v1127 = vsel %vm1123, %v1098, %v727
      %v1128 = vsel %vm1123, %v1099, %v729
      %v1129 = vsel %vm1123, %v1100, %v731
      %v1130 = vsel %vm1123, %v1101, %v733
      %v1131 = vsel %vm1123, %v1102, %v735
      %v1132 = vsel %vm1123, %v1103, %v737
      %v1133 = vsel %vm1123, %v1104, %v739
      %v1134 = vsel %vm1123, %v1105, %v741
      %v1135 = vsel %vm1123, %v1106, %v743
      %v1136 = vsel %vm1123, %v1107, %v745
      %v1137 = vsel %vm1123, %v1108, %v747
      %v1138 = vsel %vm1123, %v1109, %v749
      %v1139 = vsel %vm1123, %v1110, %v751
      %v1140 = vsel %vm1123, %v1111, %v753
      %v1141 = vsel %vm1123, %v1112, %v755
      %v1142 = vsel %vm1123, %v1113, %v757
      %v1143 = vsel %vm1123, %v1114, %v759
      %v1144 = vsel %vm1123, %v1115, %v761
      %v1145 = vsel %vm1123, %v1116, %v763
      %v1146 = vsel %vm1123, %v1117, %v765
      %v1147 = vsel %vm1123, %v1118, %v767
      %v1148 = vsel %vm1123, %v1119, %v769
      %v1149 = vsel %vm1123, %v1120, %v771
      %v1150 = vsel %vm1123, %v1121, %v773
      %v1151 = vsel %vm1123, %v1122, %v775
      %vm1152 = vcmask 228352
      %v1153 = vsel %vm1152, %v1124, %v808
      %v1154 = vsel %vm1152, %v1125, %v810
      %v1155 = vsel %vm1152, %v1126, %v812
      %v1156 = vsel %vm1152, %v1127, %v814
      %v1157 = vsel %vm1152, %v1128, %v816
      %v1158 = vsel %vm1152, %v1129, %v818
      %v1159 = vsel %vm1152, %v1130, %v820
      %v1160 = vsel %vm1152, %v1131, %v822
      %v1161 = vsel %vm1152, %v1132, %v824
      %v1162 = vsel %vm1152, %v1133, %v826
      %v1163 = vsel %vm1152, %v1134, %v828
      %v1164 = vsel %vm1152, %v1135, %v830
      %v1165 = vsel %vm1152, %v1136, %v832
      %v1166 = vsel %vm1152, %v1137, %v834
      %v1167 = vsel %vm1152, %v1138, %v836
      %v1168 = vsel %vm1152, %v1139, %v838
      %v1169 = vsel %vm1152, %v1140, %v840
      %v1170 = vsel %vm1152, %v1141, %v842
      %v1171 = vsel %vm1152, %v1142, %v844
      %v1172 = vsel %vm1152, %v1143, %v846
      %v1173 = vsel %vm1152, %v1144, %v848
      %v1174 = vsel %vm1152, %v1145, %v850
      %v1175 = vsel %vm1152, %v1146, %v852
      %v1176 = vsel %vm1152, %v1147, %v854
      %v1177 = vsel %vm1152, %v1148, %v856
      %v1178 = vsel %vm1152, %v1149, %v858
      %v1179 = vsel %vm1152, %v1150, %v860
      %v1180 = vsel %vm1152, %v1151, %v862
      %vm1181 = vcmask 261120
      %v1182 = vsel %vm1181, %v1153, %v895
      %v1183 = vsel %vm1181, %v1154, %v897
      %v1184 = vsel %vm1181, %v1155, %v899
      %v1185 = vsel %vm1181, %v1156, %v901
      %v1186 = vsel %vm1181, %v1157, %v903
      %v1187 = vsel %vm1181, %v1158, %v905
      %v1188 = vsel %vm1181, %v1159, %v907
      %v1189 = vsel %vm1181, %v1160, %v909
      %v1190 = vsel %vm1181, %v1161, %v911
      %v1191 = vsel %vm1181, %v1162, %v913
      %v1192 = vsel %vm1181, %v1163, %v915
      %v1193 = vsel %vm1181, %v1164, %v917
      %v1194 = vsel %vm1181, %v1165, %v919
      %v1195 = vsel %vm1181, %v1166, %v921
      %v1196 = vsel %vm1181, %v1167, %v923
      %v1197 = vsel %vm1181, %v1168, %v925
      %v1198 = vsel %vm1181, %v1169, %v927
      %v1199 = vsel %vm1181, %v1170, %v929
      %v1200 = vsel %vm1181, %v1171, %v931
      %v1201 = vsel %vm1181, %v1172, %v933
      %v1202 = vsel %vm1181, %v1173, %v935
      %v1203 = vsel %vm1181, %v1174, %v937
      %v1204 = vsel %vm1181, %v1175, %v939
      %v1205 = vsel %vm1181, %v1176, %v941
      %v1206 = vsel %vm1181, %v1177, %v943
      %v1207 = vsel %vm1181, %v1178, %v945
      %v1208 = vsel %vm1181, %v1179, %v947
      %v1209 = vsel %vm1181, %v1180, %v949
      %v1238 = vcombine.high %v1182, %v1182
      %v1240 = vunpack.c.l.s4 1983009808
      %v1241 = vunpack.c.0.s8 %v1240
      %v1242 = vlaneseq
      %v1243 = vshrl.u32 %v1242, 7
      %v1244 = vsub.s32 %v1241, %v1243
      %v1245 = vrot.slane %v1182, %v1244
      %v1247 = vunpack.c.l.s4 1983009808
      %v1248 = vunpack.c.0.s8 %v1247
      %v1249 = vlaneseq
      %v1250 = vshrl.u32 %v1249, 7
      %v1251 = vsub.s32 %v1248, %v1250
      %v1252 = vrot.slane %v1238, %v1251
      %v1253 = vcombine.high %v1245, %v1245
      %v1254 = vcombine.high %v1252, %v1252
      %v1255 = vcombine.high %v1183, %v1183
      %v1257 = vunpack.c.l.s4 1983009808
      %v1258 = vunpack.c.0.s8 %v1257
      %v1259 = vlaneseq
      %v1260 = vshrl.u32 %v1259, 7
      %v1261 = vsub.s32 %v1258, %v1260
      %v1262 = vrot.slane %v1183, %v1261
      %v1264 = vunpack.c.l.s4 1983009808
      %v1265 = vunpack.c.0.s8 %v1264
      %v1266 = vlaneseq
      %v1267 = vshrl.u32 %v1266, 7
      %v1268 = vsub.s32 %v1265, %v1267
      %v1269 = vrot.slane %v1255, %v1268
      %v1270 = vcombine.high %v1262, %v1262
      %v1271 = vcombine.high %v1184, %v1184
      %v1273 = vunpack.c.l.s4 1983009808
      %v1274 = vunpack.c.0.s8 %v1273
      %v1275 = vlaneseq
      %v1276 = vshrl.u32 %v1275, 7
      %v1277 = vsub.s32 %v1274, %v1276
      %v1278 = vrot.slane %v1184, %v1277
      %v1280 = vunpack.c.l.s4 1983009808
      %v1281 = vunpack.c.0.s8 %v1280
      %v1282 = vlaneseq
      %v1283 = vshrl.u32 %v1282, 7
      %v1284 = vsub.s32 %v1281, %v1283
      %v1285 = vrot.slane %v1271, %v1284
      %v1286 = vcombine.high %v1278, %v1278
      %v1287 = vcombine.high %v1285, %v1285
      %v1288 = vcombine.high %v1185, %v1185
      %v1290 = vunpack.c.l.s4 1983009808
      %v1291 = vunpack.c.0.s8 %v1290
      %v1292 = vlaneseq
      %v1293 = vshrl.u32 %v1292, 7
      %v1294 = vsub.s32 %v1291, %v1293
      %v1295 = vrot.slane %v1185, %v1294
      %v1297 = vunpack.c.l.s4 1983009808
      %v1298 = vunpack.c.0.s8 %v1297
      %v1299 = vlaneseq
      %v1300 = vshrl.u32 %v1299, 7
      %v1301 = vsub.s32 %v1298, %v1300
      %v1302 = vrot.slane %v1288, %v1301
      %v1303 = vcombine.high %v1295, %v1295
      %v1304 = vcombine.high %v1186, %v1186
      %v1306 = vunpack.c.l.s4 1983009808
      %v1307 = vunpack.c.0.s8 %v1306
      %v1308 = vlaneseq
      %v1309 = vshrl.u32 %v1308, 7
      %v1310 = vsub.s32 %v1307, %v1309
      %v1311 = vrot.slane %v1186, %v1310
      %v1313 = vunpack.c.l.s4 1983009808
      %v1314 = vunpack.c.0.s8 %v1313
      %v1315 = vlaneseq
      %v1316 = vshrl.u32 %v1315, 7
      %v1317 = vsub.s32 %v1314, %v1316
      %v1318 = vrot.slane %v1304, %v1317
      %v1319 = vcombine.high %v1311, %v1311
      %v1320 = vcombine.high %v1318, %v1318
      %v1321 = vcombine.high %v1187, %v1187
      %v1323 = vunpack.c.l.s4 1983009808
      %v1324 = vunpack.c.0.s8 %v1323
      %v1325 = vlaneseq
      %v1326 = vshrl.u32 %v1325, 7
      %v1327 = vsub.s32 %v1324, %v1326
      %v1328 = vrot.slane %v1187, %v1327
      %v1330 = vunpack.c.l.s4 1983009808
      %v1331 = vunpack.c.0.s8 %v1330
      %v1332 = vlaneseq
      %v1333 = vshrl.u32 %v1332, 7
      %v1334 = vsub.s32 %v1331, %v1333
      %v1335 = vrot.slane %v1321, %v1334
      %v1336 = vcombine.high %v1328, %v1328
      %v1337 = vcombine.high %v1188, %v1188
      %v1339 = vunpack.c.l.s4 1983009808
      %v1340 = vunpack.c.0.s8 %v1339
      %v1341 = vlaneseq
      %v1342 = vshrl.u32 %v1341, 7
      %v1343 = vsub.s32 %v1340, %v1342
      %v1344 = vrot.slane %v1188, %v1343
      %v1346 = vunpack.c.l.s4 1983009808
      %v1347 = vunpack.c.0.s8 %v1346
      %v1348 = vlaneseq
      %v1349 = vshrl.u32 %v1348, 7
      %v1350 = vsub.s32 %v1347, %v1349
      %v1351 = vrot.slane %v1337, %v1350
      %v1352 = vcombine.high %v1344, %v1344
      %v1353 = vcombine.high %v1351, %v1351
      %v1354 = vcombine.high %v1189, %v1189
      %v1356 = vunpack.c.l.s4 1983009808
      %v1357 = vunpack.c.0.s8 %v1356
      %v1358 = vlaneseq
      %v1359 = vshrl.u32 %v1358, 7
      %v1360 = vsub.s32 %v1357, %v1359
      %v1361 = vrot.slane %v1189, %v1360
      %v1363 = vunpack.c.l.s4 1983009808
      %v1364 = vunpack.c.0.s8 %v1363
      %v1365 = vlaneseq
      %v1366 = vshrl.u32 %v1365, 7
      %v1367 = vsub.s32 %v1364, %v1366
      %v1368 = vrot.slane %v1354, %v1367
      %v1369 = vcombine.high %v1361, %v1361
      %v1370 = vcombine.high %v1190, %v1190
      %v1372 = vunpack.c.l.s4 1983009808
      %v1373 = vunpack.c.0.s8 %v1372
      %v1374 = vlaneseq
      %v1375 = vshrl.u32 %v1374, 7
      %v1376 = vsub.s32 %v1373, %v1375
      %v1377 = vrot.slane %v1190, %v1376
      %v1379 = vunpack.c.l.s4 1983009808
      %v1380 = vunpack.c.0.s8 %v1379
      %v1381 = vlaneseq
      %v1382 = vshrl.u32 %v1381, 7
      %v1383 = vsub.s32 %v1380, %v1382
      %v1384 = vrot.slane %v1370, %v1383
      %v1385 = vcombine.high %v1377, %v1377
      %v1386 = vcombine.high %v1384, %v1384
      %v1387 = vcombine.high %v1191, %v1191
      %v1389 = vunpack.c.l.s4 1983009808
      %v1390 = vunpack.c.0.s8 %v1389
      %v1391 = vlaneseq
      %v1392 = vshrl.u32 %v1391, 7
      %v1393 = vsub.s32 %v1390, %v1392
      %v1394 = vrot.slane %v1191, %v1393
      %v1396 = vunpack.c.l.s4 1983009808
      %v1397 = vunpack.c.0.s8 %v1396
      %v1398 = vlaneseq
      %v1399 = vshrl.u32 %v1398, 7
      %v1400 = vsub.s32 %v1397, %v1399
      %v1401 = vrot.slane %v1387, %v1400
      %v1402 = vcombine.high %v1394, %v1394
      %v1403 = vcombine.high %v1192, %v1192
      %v1405 = vunpack.c.l.s4 1983009808
      %v1406 = vunpack.c.0.s8 %v1405
      %v1407 = vlaneseq
      %v1408 = vshrl.u32 %v1407, 7
      %v1409 = vsub.s32 %v1406, %v1408
      %v1410 = vrot.slane %v1192, %v1409
      %v1412 = vunpack.c.l.s4 1983009808
      %v1413 = vunpack.c.0.s8 %v1412
      %v1414 = vlaneseq
      %v1415 = vshrl.u32 %v1414, 7
      %v1416 = vsub.s32 %v1413, %v1415
      %v1417 = vrot.slane %v1403, %v1416
      %v1418 = vcombine.high %v1410, %v1410
      %v1419 = vcombine.high %v1417, %v1417
      %v1420 = vcombine.high %v1193, %v1193
      %v1422 = vunpack.c.l.s4 1983009808
      %v1423 = vunpack.c.0.s8 %v1422
      %v1424 = vlaneseq
      %v1425 = vshrl.u32 %v1424, 7
      %v1426 = vsub.s32 %v1423, %v1425
      %v1427 = vrot.slane %v1193, %v1426
      %v1429 = vunpack.c.l.s4 1983009808
      %v1430 = vunpack.c.0.s8 %v1429
      %v1431 = vlaneseq
      %v1432 = vshrl.u32 %v1431, 7
      %v1433 = vsub.s32 %v1430, %v1432
      %v1434 = vrot.slane %v1420, %v1433
      %v1435 = vcombine.high %v1427, %v1427
      %v1436 = vcombine.high %v1194, %v1194
      %v1438 = vunpack.c.l.s4 1983009808
      %v1439 = vunpack.c.0.s8 %v1438
      %v1440 = vlaneseq
      %v1441 = vshrl.u32 %v1440, 7
      %v1442 = vsub.s32 %v1439, %v1441
      %v1443 = vrot.slane %v1194, %v1442
      %v1445 = vunpack.c.l.s4 1983009808
      %v1446 = vunpack.c.0.s8 %v1445
      %v1447 = vlaneseq
      %v1448 = vshrl.u32 %v1447, 7
      %v1449 = vsub.s32 %v1446, %v1448
      %v1450 = vrot.slane %v1436, %v1449
      %v1451 = vcombine.high %v1443, %v1443
      %v1452 = vcombine.high %v1450, %v1450
      %v1453 = vcombine.high %v1195, %v1195
      %v1455 = vunpack.c.l.s4 1983009808
      %v1456 = vunpack.c.0.s8 %v1455
      %v1457 = vlaneseq
      %v1458 = vshrl.u32 %v1457, 7
      %v1459 = vsub.s32 %v1456, %v1458
      %v1460 = vrot.slane %v1195, %v1459
      %v1462 = vunpack.c.l.s4 1983009808
      %v1463 = vunpack.c.0.s8 %v1462
      %v1464 = vlaneseq
      %v1465 = vshrl.u32 %v1464, 7
      %v1466 = vsub.s32 %v1463, %v1465
      %v1467 = vrot.slane %v1453, %v1466
      %v1468 = vcombine.high %v1460, %v1460
      %v1469 = vcombine.high %v1196, %v1196
      %v1471 = vunpack.c.l.s4 1983009808
      %v1472 = vunpack.c.0.s8 %v1471
      %v1473 = vlaneseq
      %v1474 = vshrl.u32 %v1473, 7
      %v1475 = vsub.s32 %v1472, %v1474
      %v1476 = vrot.slane %v1196, %v1475
      %v1478 = vunpack.c.l.s4 1983009808
      %v1479 = vunpack.c.0.s8 %v1478
      %v1480 = vlaneseq
      %v1481 = vshrl.u32 %v1480, 7
      %v1482 = vsub.s32 %v1479, %v1481
      %v1483 = vrot.slane %v1469, %v1482
      %v1484 = vcombine.high %v1476, %v1476
      %v1485 = vcombine.high %v1483, %v1483
      %v1486 = vcombine.high %v1197, %v1197
      %v1488 = vunpack.c.l.s4 1983009808
      %v1489 = vunpack.c.0.s8 %v1488
      %v1490 = vlaneseq
      %v1491 = vshrl.u32 %v1490, 7
      %v1492 = vsub.s32 %v1489, %v1491
      %v1493 = vrot.slane %v1197, %v1492
      %v1495 = vunpack.c.l.s4 1983009808
      %v1496 = vunpack.c.0.s8 %v1495
      %v1497 = vlaneseq
      %v1498 = vshrl.u32 %v1497, 7
      %v1499 = vsub.s32 %v1496, %v1498
      %v1500 = vrot.slane %v1486, %v1499
      %v1501 = vcombine.high %v1493, %v1493
      %v1502 = vcombine.high %v1198, %v1198
      %v1504 = vunpack.c.l.s4 1983009808
      %v1505 = vunpack.c.0.s8 %v1504
      %v1506 = vlaneseq
      %v1507 = vshrl.u32 %v1506, 7
      %v1508 = vsub.s32 %v1505, %v1507
      %v1509 = vrot.slane %v1198, %v1508
      %v1511 = vunpack.c.l.s4 1983009808
      %v1512 = vunpack.c.0.s8 %v1511
      %v1513 = vlaneseq
      %v1514 = vshrl.u32 %v1513, 7
      %v1515 = vsub.s32 %v1512, %v1514
      %v1516 = vrot.slane %v1502, %v1515
      %v1517 = vcombine.high %v1509, %v1509
      %v1518 = vcombine.high %v1516, %v1516
      %v1519 = vcombine.high %v1199, %v1199
      %v1521 = vunpack.c.l.s4 1983009808
      %v1522 = vunpack.c.0.s8 %v1521
      %v1523 = vlaneseq
      %v1524 = vshrl.u32 %v1523, 7
      %v1525 = vsub.s32 %v1522, %v1524
      %v1526 = vrot.slane %v1199, %v1525
      %v1528 = vunpack.c.l.s4 1983009808
      %v1529 = vunpack.c.0.s8 %v1528
      %v1530 = vlaneseq
      %v1531 = vshrl.u32 %v1530, 7
      %v1532 = vsub.s32 %v1529, %v1531
      %v1533 = vrot.slane %v1519, %v1532
      %v1534 = vcombine.high %v1526, %v1526
      %v1535 = vcombine.high %v1200, %v1200
      %v1537 = vunpack.c.l.s4 1983009808
      %v1538 = vunpack.c.0.s8 %v1537
      %v1539 = vlaneseq
      %v1540 = vshrl.u32 %v1539, 7
      %v1541 = vsub.s32 %v1538, %v1540
      %v1542 = vrot.slane %v1200, %v1541
      %v1544 = vunpack.c.l.s4 1983009808
      %v1545 = vunpack.c.0.s8 %v1544
      %v1546 = vlaneseq
      %v1547 = vshrl.u32 %v1546, 7
      %v1548 = vsub.s32 %v1545, %v1547
      %v1549 = vrot.slane %v1535, %v1548
      %v1550 = vcombine.high %v1542, %v1542
      %v1551 = vcombine.high %v1549, %v1549
      %v1552 = vcombine.high %v1201, %v1201
      %v1554 = vunpack.c.l.s4 1983009808
      %v1555 = vunpack.c.0.s8 %v1554
      %v1556 = vlaneseq
      %v1557 = vshrl.u32 %v1556, 7
      %v1558 = vsub.s32 %v1555, %v1557
      %v1559 = vrot.slane %v1201, %v1558
      %v1561 = vunpack.c.l.s4 1983009808
      %v1562 = vunpack.c.0.s8 %v1561
      %v1563 = vlaneseq
      %v1564 = vshrl.u32 %v1563, 7
      %v1565 = vsub.s32 %v1562, %v1564
      %v1566 = vrot.slane %v1552, %v1565
      %v1567 = vcombine.high %v1559, %v1559
      %v1568 = vcombine.high %v1202, %v1202
      %v1570 = vunpack.c.l.s4 1983009808
      %v1571 = vunpack.c.0.s8 %v1570
      %v1572 = vlaneseq
      %v1573 = vshrl.u32 %v1572, 7
      %v1574 = vsub.s32 %v1571, %v1573
      %v1575 = vrot.slane %v1202, %v1574
      %v1577 = vunpack.c.l.s4 1983009808
      %v1578 = vunpack.c.0.s8 %v1577
      %v1579 = vlaneseq
      %v1580 = vshrl.u32 %v1579, 7
      %v1581 = vsub.s32 %v1578, %v1580
      %v1582 = vrot.slane %v1568, %v1581
      %v1583 = vcombine.high %v1575, %v1575
      %v1584 = vcombine.high %v1582, %v1582
      %v1585 = vcombine.high %v1203, %v1203
      %v1587 = vunpack.c.l.s4 1983009808
      %v1588 = vunpack.c.0.s8 %v1587
      %v1589 = vlaneseq
      %v1590 = vshrl.u32 %v1589, 7
      %v1591 = vsub.s32 %v1588, %v1590
      %v1592 = vrot.slane %v1203, %v1591
      %v1594 = vunpack.c.l.s4 1983009808
      %v1595 = vunpack.c.0.s8 %v1594
      %v1596 = vlaneseq
      %v1597 = vshrl.u32 %v1596, 7
      %v1598 = vsub.s32 %v1595, %v1597
      %v1599 = vrot.slane %v1585, %v1598
      %v1600 = vcombine.high %v1592, %v1592
      %v1601 = vcombine.high %v1204, %v1204
      %v1603 = vunpack.c.l.s4 1983009808
      %v1604 = vunpack.c.0.s8 %v1603
      %v1605 = vlaneseq
      %v1606 = vshrl.u32 %v1605, 7
      %v1607 = vsub.s32 %v1604, %v1606
      %v1608 = vrot.slane %v1204, %v1607
      %v1610 = vunpack.c.l.s4 1983009808
      %v1611 = vunpack.c.0.s8 %v1610
      %v1612 = vlaneseq
      %v1613 = vshrl.u32 %v1612, 7
      %v1614 = vsub.s32 %v1611, %v1613
      %v1615 = vrot.slane %v1601, %v1614
      %v1616 = vcombine.high %v1608, %v1608
      %v1617 = vcombine.high %v1615, %v1615
      %v1618 = vcombine.high %v1205, %v1205
      %v1620 = vunpack.c.l.s4 1983009808
      %v1621 = vunpack.c.0.s8 %v1620
      %v1622 = vlaneseq
      %v1623 = vshrl.u32 %v1622, 7
      %v1624 = vsub.s32 %v1621, %v1623
      %v1625 = vrot.slane %v1205, %v1624
      %v1627 = vunpack.c.l.s4 1983009808
      %v1628 = vunpack.c.0.s8 %v1627
      %v1629 = vlaneseq
      %v1630 = vshrl.u32 %v1629, 7
      %v1631 = vsub.s32 %v1628, %v1630
      %v1632 = vrot.slane %v1618, %v1631
      %v1633 = vcombine.high %v1625, %v1625
      %v1634 = vcombine.high %v1206, %v1206
      %v1636 = vunpack.c.l.s4 1983009808
      %v1637 = vunpack.c.0.s8 %v1636
      %v1638 = vlaneseq
      %v1639 = vshrl.u32 %v1638, 7
      %v1640 = vsub.s32 %v1637, %v1639
      %v1641 = vrot.slane %v1206, %v1640
      %v1643 = vunpack.c.l.s4 1983009808
      %v1644 = vunpack.c.0.s8 %v1643
      %v1645 = vlaneseq
      %v1646 = vshrl.u32 %v1645, 7
      %v1647 = vsub.s32 %v1644, %v1646
      %v1648 = vrot.slane %v1634, %v1647
      %v1649 = vcombine.high %v1641, %v1641
      %v1650 = vcombine.high %v1648, %v1648
      %v1651 = vcombine.high %v1207, %v1207
      %v1653 = vunpack.c.l.s4 1983009808
      %v1654 = vunpack.c.0.s8 %v1653
      %v1655 = vlaneseq
      %v1656 = vshrl.u32 %v1655, 7
      %v1657 = vsub.s32 %v1654, %v1656
      %v1658 = vrot.slane %v1207, %v1657
      %v1660 = vunpack.c.l.s4 1983009808
      %v1661 = vunpack.c.0.s8 %v1660
      %v1662 = vlaneseq
      %v1663 = vshrl.u32 %v1662, 7
      %v1664 = vsub.s32 %v1661, %v1663
      %v1665 = vrot.slane %v1651, %v1664
      %v1666 = vcombine.high %v1658, %v1658
      %v1667 = vcombine.high %v1208, %v1208
      %v1669 = vunpack.c.l.s4 1983009808
      %v1670 = vunpack.c.0.s8 %v1669
      %v1671 = vlaneseq
      %v1672 = vshrl.u32 %v1671, 7
      %v1673 = vsub.s32 %v1670, %v1672
      %v1674 = vrot.slane %v1208, %v1673
      %v1676 = vunpack.c.l.s4 1983009808
      %v1677 = vunpack.c.0.s8 %v1676
      %v1678 = vlaneseq
      %v1679 = vshrl.u32 %v1678, 7
      %v1680 = vsub.s32 %v1677, %v1679
      %v1681 = vrot.slane %v1667, %v1680
      %v1682 = vcombine.high %v1674, %v1674
      %v1683 = vcombine.high %v1681, %v1681
      %v1684 = vcombine.high %v1209, %v1209
      %v1686 = vunpack.c.l.s4 1983009808
      %v1687 = vunpack.c.0.s8 %v1686
      %v1688 = vlaneseq
      %v1689 = vshrl.u32 %v1688, 7
      %v1690 = vsub.s32 %v1687, %v1689
      %v1691 = vrot.slane %v1209, %v1690
      %v1693 = vunpack.c.l.s4 1983009808
      %v1694 = vunpack.c.0.s8 %v1693
      %v1695 = vlaneseq
      %v1696 = vshrl.u32 %v1695, 7
      %v1697 = vsub.s32 %v1694, %v1696
      %v1698 = vrot.slane %v1684, %v1697
      %v1699 = vcombine.high %v1691, %v1691
      %v1700 = vld [vmem:[%s1] sm:$0xff]
      %v1701 = vld [vmem:[%s1 + $0x8] sm:$0xff]
      %v1702 = vld [vmem:[%s1 + $0x10] sm:$0xff]
      %v1703 = vld [vmem:[%s1 + $0x18] sm:$0xff]
      %v1704 = vld [vmem:[%s1 + $0x20] sm:$0xf]
      %v1705 = vcombine.low %v1245, %v1253
      %v1706 = vcombine.low %v1252, %v1254
      %v1708 = vunpack.c.l.s4 1983009808
      %v1709 = vunpack.c.0.s8 %v1708
      %v1710 = vlaneseq
      %v1711 = vshrl.u32 %v1710, 7
      %v1712 = vsub.s32 %v1709, %v1711
      %v1713 = vrot.slane %v1705, %v1712
      %v1715 = vunpack.c.l.s4 1983009808
      %v1716 = vunpack.c.0.s8 %v1715
      %v1717 = vlaneseq
      %v1718 = vshrl.u32 %v1717, 7
      %v1719 = vsub.s32 %v1716, %v1718
      %v1720 = vrot.slane %v1706, %v1719
      %v1721 = vcombine.low %v1713, %v1720
      %v1722 = vcombine.low %v1262, %v1270
      %v1723 = vcombine.low %v1269, %v1278
      %v1725 = vunpack.c.l.s4 1983009808
      %v1726 = vunpack.c.0.s8 %v1725
      %v1727 = vlaneseq
      %v1728 = vshrl.u32 %v1727, 7
      %v1729 = vsub.s32 %v1726, %v1728
      %v1730 = vrot.slane %v1722, %v1729
      %v1732 = vunpack.c.l.s4 1983009808
      %v1733 = vunpack.c.0.s8 %v1732
      %v1734 = vlaneseq
      %v1735 = vshrl.u32 %v1734, 7
      %v1736 = vsub.s32 %v1733, %v1735
      %v1737 = vrot.slane %v1723, %v1736
      %v1738 = vcombine.low %v1730, %v1737
      %v1739 = vcombine.low %v1286, %v1285
      %v1740 = vcombine.low %v1287, %v1295
      %v1742 = vunpack.c.l.s4 1983009808
      %v1743 = vunpack.c.0.s8 %v1742
      %v1744 = vlaneseq
      %v1745 = vshrl.u32 %v1744, 7
      %v1746 = vsub.s32 %v1743, %v1745
      %v1747 = vrot.slane %v1739, %v1746
      %v1749 = vunpack.c.l.s4 1983009808
      %v1750 = vunpack.c.0.s8 %v1749
      %v1751 = vlaneseq
      %v1752 = vshrl.u32 %v1751, 7
      %v1753 = vsub.s32 %v1750, %v1752
      %v1754 = vrot.slane %v1740, %v1753
      %v1755 = vcombine.low %v1747, %v1754
      %v1756 = vcombine.low %v1303, %v1302
      %v1757 = vcombine.low %v1311, %v1319
      %v1759 = vunpack.c.l.s4 1983009808
      %v1760 = vunpack.c.0.s8 %v1759
      %v1761 = vlaneseq
      %v1762 = vshrl.u32 %v1761, 7
      %v1763 = vsub.s32 %v1760, %v1762
      %v1764 = vrot.slane %v1756, %v1763
      %v1766 = vunpack.c.l.s4 1983009808
      %v1767 = vunpack.c.0.s8 %v1766
      %v1768 = vlaneseq
      %v1769 = vshrl.u32 %v1768, 7
      %v1770 = vsub.s32 %v1767, %v1769
      %v1771 = vrot.slane %v1757, %v1770
      %v1772 = vcombine.low %v1764, %v1771
      %v1773 = vcombine.low %v1318, %v1320
      %v1774 = vcombine.low %v1328, %v1336
      %v1776 = vunpack.c.l.s4 1983009808
      %v1777 = vunpack.c.0.s8 %v1776
      %v1778 = vlaneseq
      %v1779 = vshrl.u32 %v1778, 7
      %v1780 = vsub.s32 %v1777, %v1779
      %v1781 = vrot.slane %v1773, %v1780
      %v1783 = vunpack.c.l.s4 1983009808
      %v1784 = vunpack.c.0.s8 %v1783
      %v1785 = vlaneseq
      %v1786 = vshrl.u32 %v1785, 7
      %v1787 = vsub.s32 %v1784, %v1786
      %v1788 = vrot.slane %v1774, %v1787
      %v1789 = vcombine.low %v1781, %v1788
      %v1790 = vcombine.low %v1335, %v1344
      %v1791 = vcombine.low %v1352, %v1351
      %v1793 = vunpack.c.l.s4 1983009808
      %v1794 = vunpack.c.0.s8 %v1793
      %v1795 = vlaneseq
      %v1796 = vshrl.u32 %v1795, 7
      %v1797 = vsub.s32 %v1794, %v1796
      %v1798 = vrot.slane %v1790, %v1797
      %v1800 = vunpack.c.l.s4 1983009808
      %v1801 = vunpack.c.0.s8 %v1800
      %v1802 = vlaneseq
      %v1803 = vshrl.u32 %v1802, 7
      %v1804 = vsub.s32 %v1801, %v1803
      %v1805 = vrot.slane %v1791, %v1804
      %v1806 = vcombine.low %v1798, %v1805
      %v1807 = vcombine.low %v1353, %v1361
      %v1808 = vcombine.low %v1369, %v1368
      %v1810 = vunpack.c.l.s4 1983009808
      %v1811 = vunpack.c.0.s8 %v1810
      %v1812 = vlaneseq
      %v1813 = vshrl.u32 %v1812, 7
      %v1814 = vsub.s32 %v1811, %v1813
      %v1815 = vrot.slane %v1807, %v1814
      %v1817 = vunpack.c.l.s4 1983009808
      %v1818 = vunpack.c.0.s8 %v1817
      %v1819 = vlaneseq
      %v1820 = vshrl.u32 %v1819, 7
      %v1821 = vsub.s32 %v1818, %v1820
      %v1822 = vrot.slane %v1808, %v1821
      %v1823 = vcombine.low %v1815, %v1822
      %v1824 = vcombine.low %v1377, %v1385
      %v1825 = vcombine.low %v1384, %v1386
      %v1827 = vunpack.c.l.s4 1983009808
      %v1828 = vunpack.c.0.s8 %v1827
      %v1829 = vlaneseq
      %v1830 = vshrl.u32 %v1829, 7
      %v1831 = vsub.s32 %v1828, %v1830
      %v1832 = vrot.slane %v1824, %v1831
      %v1834 = vunpack.c.l.s4 1983009808
      %v1835 = vunpack.c.0.s8 %v1834
      %v1836 = vlaneseq
      %v1837 = vshrl.u32 %v1836, 7
      %v1838 = vsub.s32 %v1835, %v1837
      %v1839 = vrot.slane %v1825, %v1838
      %v1840 = vcombine.low %v1832, %v1839
      %v1841 = vcombine.low %v1394, %v1402
      %v1842 = vcombine.low %v1401, %v1410
      %v1844 = vunpack.c.l.s4 1983009808
      %v1845 = vunpack.c.0.s8 %v1844
      %v1846 = vlaneseq
      %v1847 = vshrl.u32 %v1846, 7
      %v1848 = vsub.s32 %v1845, %v1847
      %v1849 = vrot.slane %v1841, %v1848
      %v1851 = vunpack.c.l.s4 1983009808
      %v1852 = vunpack.c.0.s8 %v1851
      %v1853 = vlaneseq
      %v1854 = vshrl.u32 %v1853, 7
      %v1855 = vsub.s32 %v1852, %v1854
      %v1856 = vrot.slane %v1842, %v1855
      %v1857 = vcombine.low %v1849, %v1856
      %v1858 = vcombine.low %v1418, %v1417
      %v1859 = vcombine.low %v1419, %v1427
      %v1861 = vunpack.c.l.s4 1983009808
      %v1862 = vunpack.c.0.s8 %v1861
      %v1863 = vlaneseq
      %v1864 = vshrl.u32 %v1863, 7
      %v1865 = vsub.s32 %v1862, %v1864
      %v1866 = vrot.slane %v1858, %v1865
      %v1868 = vunpack.c.l.s4 1983009808
      %v1869 = vunpack.c.0.s8 %v1868
      %v1870 = vlaneseq
      %v1871 = vshrl.u32 %v1870, 7
      %v1872 = vsub.s32 %v1869, %v1871
      %v1873 = vrot.slane %v1859, %v1872
      %v1874 = vcombine.low %v1866, %v1873
      %v1875 = vcombine.low %v1435, %v1434
      %v1876 = vcombine.low %v1443, %v1451
      %v1878 = vunpack.c.l.s4 1983009808
      %v1879 = vunpack.c.0.s8 %v1878
      %v1880 = vlaneseq
      %v1881 = vshrl.u32 %v1880, 7
      %v1882 = vsub.s32 %v1879, %v1881
      %v1883 = vrot.slane %v1875, %v1882
      %v1885 = vunpack.c.l.s4 1983009808
      %v1886 = vunpack.c.0.s8 %v1885
      %v1887 = vlaneseq
      %v1888 = vshrl.u32 %v1887, 7
      %v1889 = vsub.s32 %v1886, %v1888
      %v1890 = vrot.slane %v1876, %v1889
      %v1891 = vcombine.low %v1883, %v1890
      %v1892 = vcombine.low %v1450, %v1452
      %v1893 = vcombine.low %v1460, %v1468
      %v1895 = vunpack.c.l.s4 1983009808
      %v1896 = vunpack.c.0.s8 %v1895
      %v1897 = vlaneseq
      %v1898 = vshrl.u32 %v1897, 7
      %v1899 = vsub.s32 %v1896, %v1898
      %v1900 = vrot.slane %v1892, %v1899
      %v1902 = vunpack.c.l.s4 1983009808
      %v1903 = vunpack.c.0.s8 %v1902
      %v1904 = vlaneseq
      %v1905 = vshrl.u32 %v1904, 7
      %v1906 = vsub.s32 %v1903, %v1905
      %v1907 = vrot.slane %v1893, %v1906
      %v1908 = vcombine.low %v1900, %v1907
      %v1909 = vcombine.low %v1467, %v1476
      %v1910 = vcombine.low %v1484, %v1483
      %v1912 = vunpack.c.l.s4 1983009808
      %v1913 = vunpack.c.0.s8 %v1912
      %v1914 = vlaneseq
      %v1915 = vshrl.u32 %v1914, 7
      %v1916 = vsub.s32 %v1913, %v1915
      %v1917 = vrot.slane %v1909, %v1916
      %v1919 = vunpack.c.l.s4 1983009808
      %v1920 = vunpack.c.0.s8 %v1919
      %v1921 = vlaneseq
      %v1922 = vshrl.u32 %v1921, 7
      %v1923 = vsub.s32 %v1920, %v1922
      %v1924 = vrot.slane %v1910, %v1923
      %v1925 = vcombine.low %v1917, %v1924
      %v1926 = vcombine.low %v1485, %v1493
      %v1927 = vcombine.low %v1501, %v1500
      %v1929 = vunpack.c.l.s4 1983009808
      %v1930 = vunpack.c.0.s8 %v1929
      %v1931 = vlaneseq
      %v1932 = vshrl.u32 %v1931, 7
      %v1933 = vsub.s32 %v1930, %v1932
      %v1934 = vrot.slane %v1926, %v1933
      %v1936 = vunpack.c.l.s4 1983009808
      %v1937 = vunpack.c.0.s8 %v1936
      %v1938 = vlaneseq
      %v1939 = vshrl.u32 %v1938, 7
      %v1940 = vsub.s32 %v1937, %v1939
      %v1941 = vrot.slane %v1927, %v1940
      %v1942 = vcombine.low %v1934, %v1941
      %v1943 = vcombine.low %v1509, %v1517
      %v1944 = vcombine.low %v1516, %v1518
      %v1946 = vunpack.c.l.s4 1983009808
      %v1947 = vunpack.c.0.s8 %v1946
      %v1948 = vlaneseq
      %v1949 = vshrl.u32 %v1948, 7
      %v1950 = vsub.s32 %v1947, %v1949
      %v1951 = vrot.slane %v1943, %v1950
      %v1953 = vunpack.c.l.s4 1983009808
      %v1954 = vunpack.c.0.s8 %v1953
      %v1955 = vlaneseq
      %v1956 = vshrl.u32 %v1955, 7
      %v1957 = vsub.s32 %v1954, %v1956
      %v1958 = vrot.slane %v1944, %v1957
      %v1959 = vcombine.low %v1951, %v1958
      %v1960 = vcombine.low %v1526, %v1534
      %v1961 = vcombine.low %v1533, %v1542
      %v1963 = vunpack.c.l.s4 1983009808
      %v1964 = vunpack.c.0.s8 %v1963
      %v1965 = vlaneseq
      %v1966 = vshrl.u32 %v1965, 7
      %v1967 = vsub.s32 %v1964, %v1966
      %v1968 = vrot.slane %v1960, %v1967
      %v1970 = vunpack.c.l.s4 1983009808
      %v1971 = vunpack.c.0.s8 %v1970
      %v1972 = vlaneseq
      %v1973 = vshrl.u32 %v1972, 7
      %v1974 = vsub.s32 %v1971, %v1973
      %v1975 = vrot.slane %v1961, %v1974
      %v1976 = vcombine.low %v1968, %v1975
      %v1977 = vcombine.low %v1550, %v1549
      %v1978 = vcombine.low %v1551, %v1559
      %v1980 = vunpack.c.l.s4 1983009808
      %v1981 = vunpack.c.0.s8 %v1980
      %v1982 = vlaneseq
      %v1983 = vshrl.u32 %v1982, 7
      %v1984 = vsub.s32 %v1981, %v1983
      %v1985 = vrot.slane %v1977, %v1984
      %v1987 = vunpack.c.l.s4 1983009808
      %v1988 = vunpack.c.0.s8 %v1987
      %v1989 = vlaneseq
      %v1990 = vshrl.u32 %v1989, 7
      %v1991 = vsub.s32 %v1988, %v1990
      %v1992 = vrot.slane %v1978, %v1991
      %v1993 = vcombine.low %v1985, %v1992
      %v1994 = vcombine.low %v1567, %v1566
      %v1995 = vcombine.low %v1575, %v1583
      %v1997 = vunpack.c.l.s4 1983009808
      %v1998 = vunpack.c.0.s8 %v1997
      %v1999 = vlaneseq
      %v2000 = vshrl.u32 %v1999, 7
      %v2001 = vsub.s32 %v1998, %v2000
      %v2002 = vrot.slane %v1994, %v2001
      %v2004 = vunpack.c.l.s4 1983009808
      %v2005 = vunpack.c.0.s8 %v2004
      %v2006 = vlaneseq
      %v2007 = vshrl.u32 %v2006, 7
      %v2008 = vsub.s32 %v2005, %v2007
      %v2009 = vrot.slane %v1995, %v2008
      %v2010 = vcombine.low %v2002, %v2009
      %v2011 = vcombine.low %v1582, %v1584
      %v2012 = vcombine.low %v1592, %v1600
      %v2014 = vunpack.c.l.s4 1983009808
      %v2015 = vunpack.c.0.s8 %v2014
      %v2016 = vlaneseq
      %v2017 = vshrl.u32 %v2016, 7
      %v2018 = vsub.s32 %v2015, %v2017
      %v2019 = vrot.slane %v2011, %v2018
      %v2021 = vunpack.c.l.s4 1983009808
      %v2022 = vunpack.c.0.s8 %v2021
      %v2023 = vlaneseq
      %v2024 = vshrl.u32 %v2023, 7
      %v2025 = vsub.s32 %v2022, %v2024
      %v2026 = vrot.slane %v2012, %v2025
      %v2027 = vcombine.low %v2019, %v2026
      %v2028 = vcombine.low %v1599, %v1608
      %v2029 = vcombine.low %v1616, %v1615
      %v2031 = vunpack.c.l.s4 1983009808
      %v2032 = vunpack.c.0.s8 %v2031
      %v2033 = vlaneseq
      %v2034 = vshrl.u32 %v2033, 7
      %v2035 = vsub.s32 %v2032, %v2034
      %v2036 = vrot.slane %v2028, %v2035
      %v2038 = vunpack.c.l.s4 1983009808
      %v2039 = vunpack.c.0.s8 %v2038
      %v2040 = vlaneseq
      %v2041 = vshrl.u32 %v2040, 7
      %v2042 = vsub.s32 %v2039, %v2041
      %v2043 = vrot.slane %v2029, %v2042
      %v2044 = vcombine.low %v2036, %v2043
      %v2045 = vcombine.low %v1617, %v1625
      %v2046 = vcombine.low %v1633, %v1632
      %v2048 = vunpack.c.l.s4 1983009808
      %v2049 = vunpack.c.0.s8 %v2048
      %v2050 = vlaneseq
      %v2051 = vshrl.u32 %v2050, 7
      %v2052 = vsub.s32 %v2049, %v2051
      %v2053 = vrot.slane %v2045, %v2052
      %v2055 = vunpack.c.l.s4 1983009808
      %v2056 = vunpack.c.0.s8 %v2055
      %v2057 = vlaneseq
      %v2058 = vshrl.u32 %v2057, 7
      %v2059 = vsub.s32 %v2056, %v2058
      %v2060 = vrot.slane %v2046, %v2059
      %v2061 = vcombine.low %v2053, %v2060
      %v2062 = vcombine.low %v1641, %v1649
      %v2063 = vcombine.low %v1648, %v1650
      %v2065 = vunpack.c.l.s4 1983009808
      %v2066 = vunpack.c.0.s8 %v2065
      %v2067 = vlaneseq
      %v2068 = vshrl.u32 %v2067, 7
      %v2069 = vsub.s32 %v2066, %v2068
      %v2070 = vrot.slane %v2062, %v2069
      %v2072 = vunpack.c.l.s4 1983009808
      %v2073 = vunpack.c.0.s8 %v2072
      %v2074 = vlaneseq
      %v2075 = vshrl.u32 %v2074, 7
      %v2076 = vsub.s32 %v2073, %v2075
      %v2077 = vrot.slane %v2063, %v2076
      %v2078 = vcombine.low %v2070, %v2077
      %v2079 = vcombine.low %v1658, %v1666
      %v2080 = vcombine.low %v1665, %v1674
      %v2082 = vunpack.c.l.s4 1983009808
      %v2083 = vunpack.c.0.s8 %v2082
      %v2084 = vlaneseq
      %v2085 = vshrl.u32 %v2084, 7
      %v2086 = vsub.s32 %v2083, %v2085
      %v2087 = vrot.slane %v2079, %v2086
      %v2089 = vunpack.c.l.s4 1983009808
      %v2090 = vunpack.c.0.s8 %v2089
      %v2091 = vlaneseq
      %v2092 = vshrl.u32 %v2091, 7
      %v2093 = vsub.s32 %v2090, %v2092
      %v2094 = vrot.slane %v2080, %v2093
      %v2095 = vcombine.low %v2087, %v2094
      %v2096 = vcombine.low %v1682, %v1681
      %v2097 = vcombine.low %v1683, %v1691
      %v2099 = vunpack.c.l.s4 1983009808
      %v2100 = vunpack.c.0.s8 %v2099
      %v2101 = vlaneseq
      %v2102 = vshrl.u32 %v2101, 7
      %v2103 = vsub.s32 %v2100, %v2102
      %v2104 = vrot.slane %v2096, %v2103
      %v2106 = vunpack.c.l.s4 1983009808
      %v2107 = vunpack.c.0.s8 %v2106
      %v2108 = vlaneseq
      %v2109 = vshrl.u32 %v2108, 7
      %v2110 = vsub.s32 %v2107, %v2109
      %v2111 = vrot.slane %v2097, %v2110
      %v2112 = vcombine.low %v2104, %v2111
      %v2113 = vcombine.low %v1699, %v1698
      %v2115 = vunpack.c.l.s4 1983009808
      %v2116 = vunpack.c.0.s8 %v2115
      %v2117 = vlaneseq
      %v2118 = vshrl.u32 %v2117, 7
      %v2119 = vsub.s32 %v2116, %v2118
      %v2120 = vrot.slane %v2113, %v2119
      %vm2121 = vcmask 293888
      %v2122 = vsel %vm2121, %v1721, 0
      %v2124 = vsel %vm2121, %v1738, 0
      %v2126 = vsel %vm2121, %v1755, 0
      %v2128 = vsel %vm2121, %v1772, 0
      %v2130 = vsel %vm2121, %v1789, 0
      %v2132 = vsel %vm2121, %v1806, 0
      %v2134 = vsel %vm2121, %v1823, 0
      %v2136 = vsel %vm2121, %v1840, 0
      %v2138 = vsel %vm2121, %v1857, 0
      %v2140 = vsel %vm2121, %v1874, 0
      %v2142 = vsel %vm2121, %v1891, 0
      %v2144 = vsel %vm2121, %v1908, 0
      %v2146 = vsel %vm2121, %v1925, 0
      %v2148 = vsel %vm2121, %v1942, 0
      %v2150 = vsel %vm2121, %v1959, 0
      %v2152 = vsel %vm2121, %v1976, 0
      %v2154 = vsel %vm2121, %v1993, 0
      %v2156 = vsel %vm2121, %v2010, 0
      %v2158 = vsel %vm2121, %v2027, 0
      %v2160 = vsel %vm2121, %v2044, 0
      %v2162 = vsel %vm2121, %v2061, 0
      %v2164 = vsel %vm2121, %v2078, 0
      %v2166 = vsel %vm2121, %v2095, 0
      %v2168 = vsel %vm2121, %v2112, 0
      %v2170 = vsel %vm2121, %v2120, 0
      %vm2172 = vcmask 1043456
      %v2174 = vsel %vm2172, %v1704, 0
      %2176 = vmatprep.subr.mxu0 0.0
      %2177 = vmatpush1.msra.mxu0 %v1700
      %2178 = vmatprep.subr.mxu0 0.0
      %2179 = vmatpush1.msra.mxu0 %v1701
      %2180 = vmatprep.subr.mxu0 0.0
      %2181 = vmatpush1.msra.mxu0 %v1702
      %2182 = vmatprep.subr.mxu0 0.0
      %2183 = vmatpush1.msra.mxu0 %v1703
      %2184 = vmatprep.subr.mxu0 0.0
      %2185 = vmatpush1.msra.mxu0 %v2174
      %2186 = vmatprep.subr.mxu0 0.0
      %2187 = vmatpush1.msra.mxu0 0.0
      %2188 = vmatprep.subr.mxu0 0.0
      %2189 = vmatpush1.msra.mxu0 0.0
      %2190 = vmatprep.subr.mxu0 0.0
      %2191 = vmatpush1.msra.mxu0 0.0
      %2192 = vmatprep.subr.mxu0 0.0
      %2193 = vmatpush1.msra.mxu0 0.0
      %2194 = vmatprep.subr.mxu0 0.0
      %2195 = vmatpush1.msra.mxu0 0.0
      %2196 = vmatprep.subr.mxu0 0.0
      %2197 = vmatpush1.msra.mxu0 0.0
      %2198 = vmatprep.subr.mxu0 0.0
      %2199 = vmatpush1.msra.mxu0 0.0
      %2200 = vmatprep.subr.mxu0 0.0
      %2201 = vmatpush1.msra.mxu0 0.0
      %2202 = vmatprep.subr.mxu0 0.0
      %2203 = vmatpush1.msra.mxu0 0.0
      %2204 = vmatprep.subr.mxu0 0.0
      %2205 = vmatpush1.msra.mxu0 0.0
      %2206 = vmatprep.subr.mxu0 0.0
      %2207 = vmatpush1.msra.mxu0 0.0
      %2208 = vmatprep.subr.mxu0 0.0
      %2209 = vmatpush1.msra.mxu0 0.0
      %2210 = vmatprep.subr.mxu0 0.0
      %2211 = vmatpush1.msra.mxu0 0.0
      %2212 = vmatprep.subr.mxu0 0.0
      %2213 = vmatpush1.msra.mxu0 0.0
      %2214 = vmatprep.subr.mxu0 0.0
      %2215 = vmatpush1.msra.mxu0 0.0
      %2216 = vmatprep.subr.mxu0 0.0
      %2217 = vmatpush1.msra.mxu0 0.0
      %2218 = vmatprep.subr.mxu0 0.0
      %2219 = vmatpush1.msra.mxu0 0.0
      %2220 = vmatprep.subr.mxu0 0.0
      %2221 = vmatpush1.msra.mxu0 0.0
      %2222 = vmatprep.subr.mxu0 0.0
      %2223 = vmatpush1.msra.mxu0 0.0
      %2224 = vmatprep.subr.mxu0 0.0
      %2225 = vmatpush1.msra.mxu0 0.0
      %2226 = vmatprep.subr.mxu0 0.0
      %2227 = vmatpush1.msra.mxu0 0.0
      %2228 = vmatprep.subr.mxu0 0.0
      %2229 = vmatpush1.msra.mxu0 0.0
      %2230 = vmatprep.subr.mxu0 0.0
      %2231 = vmatpush1.msra.mxu0 0.0
      %2232 = vmatprep.subr.mxu0 0.0
      %2233 = vmatpush1.msra.mxu0 0.0
      %2234 = vmatprep.subr.mxu0 0.0
      %2235 = vmatpush1.msra.mxu0 0.0
      %2236 = vmatprep.subr.mxu0 0.0
      %2237 = vmatpush1.msra.mxu0 0.0
      %2238 = vmatprep.subr.mxu0 0.0
      %2239 = vmatpush1.msra.mxu0 0.0
      %2240 = vmatprep.mubr.f32.mxu0 0.0
      %2241 = vmatmul.mubr.f32.gmra.mrb[0].mxu0 %v2122
      %v2242 = vpop.f32.mrb[0].mxu0
      %v2243 = vadd.f32 0.0, %v2242
      %v2244 = vpop.f32.mrb[0].mxu0
      %2245 = vmatprep.mubr.f32.mxu0 0.0
      %2246 = vmatmul.mubr.f32.gmra.mrb[0].mxu0 %v2124
      %v2247 = vpop.f32.mrb[0].mxu0
      %v2248 = vadd.f32 0.0, %v2247
      %v2249 = vpop.f32.mrb[0].mxu0
      %2250 = vmatprep.mubr.f32.mxu0 0.0
      %2251 = vmatmul.mubr.f32.gmra.mrb[0].mxu0 %v2126
      %v2252 = vpop.f32.mrb[0].mxu0
      %v2253 = vadd.f32 0.0, %v2252
      %v2254 = vpop.f32.mrb[0].mxu0
      %2255 = vmatprep.mubr.f32.mxu0 0.0
      %2256 = vmatmul.mubr.f32.gmra.mrb[0].mxu0 %v2128
      %v2257 = vpop.f32.mrb[0].mxu0
      %v2258 = vadd.f32 0.0, %v2257
      %v2259 = vpop.f32.mrb[0].mxu0
      %2260 = vmatprep.mubr.f32.mxu0 0.0
      %2261 = vmatmul.mubr.f32.gmra.mrb[0].mxu0 %v2130
      %v2262 = vpop.f32.mrb[0].mxu0
      %v2263 = vadd.f32 0.0, %v2262
      %v2264 = vpop.f32.mrb[0].mxu0
      %2265 = vmatprep.mubr.f32.mxu0 0.0
      %2266 = vmatmul.mubr.f32.gmra.mrb[0].mxu0 %v2132
      %v2267 = vpop.f32.mrb[0].mxu0
      %v2268 = vadd.f32 0.0, %v2267
      %v2269 = vpop.f32.mrb[0].mxu0
      %2270 = vmatprep.mubr.f32.mxu0 0.0
      %2271 = vmatmul.mubr.f32.gmra.mrb[0].mxu0 %v2134
      %v2272 = vpop.f32.mrb[0].mxu0
      %v2273 = vadd.f32 0.0, %v2272
      %v2274 = vpop.f32.mrb[0].mxu0
      %2275 = vmatprep.mubr.f32.mxu0 0.0
      %2276 = vmatmul.mubr.f32.gmra.mrb[0].mxu0 %v2136
      %v2277 = vpop.f32.mrb[0].mxu0
      %v2278 = vadd.f32 0.0, %v2277
      %v2279 = vpop.f32.mrb[0].mxu0
      %2280 = vmatprep.mubr.f32.mxu0 0.0
      %2281 = vmatmul.mubr.f32.gmra.mrb[0].mxu0 %v2138
      %v2282 = vpop.f32.mrb[0].mxu0
      %v2283 = vadd.f32 0.0, %v2282
      %v2284 = vpop.f32.mrb[0].mxu0
      %2285 = vmatprep.mubr.f32.mxu0 0.0
      %2286 = vmatmul.mubr.f32.gmra.mrb[0].mxu0 %v2140
      %v2287 = vpop.f32.mrb[0].mxu0
      %v2288 = vadd.f32 0.0, %v2287
      %v2289 = vpop.f32.mrb[0].mxu0
      %2290 = vmatprep.mubr.f32.mxu0 0.0
      %2291 = vmatmul.mubr.f32.gmra.mrb[0].mxu0 %v2142
      %v2292 = vpop.f32.mrb[0].mxu0
      %v2293 = vadd.f32 0.0, %v2292
      %v2294 = vpop.f32.mrb[0].mxu0
      %2295 = vmatprep.mubr.f32.mxu0 0.0
      %2296 = vmatmul.mubr.f32.gmra.mrb[0].mxu0 %v2144
      %v2297 = vpop.f32.mrb[0].mxu0
      %v2298 = vadd.f32 0.0, %v2297
      %v2299 = vpop.f32.mrb[0].mxu0
      %2300 = vmatprep.mubr.f32.mxu0 0.0
      %2301 = vmatmul.mubr.f32.gmra.mrb[0].mxu0 %v2146
      %v2302 = vpop.f32.mrb[0].mxu0
      %v2303 = vadd.f32 0.0, %v2302
      %v2304 = vpop.f32.mrb[0].mxu0
      %2305 = vmatprep.mubr.f32.mxu0 0.0
      %2306 = vmatmul.mubr.f32.gmra.mrb[0].mxu0 %v2148
      %v2307 = vpop.f32.mrb[0].mxu0
      %v2308 = vadd.f32 0.0, %v2307
      %v2309 = vpop.f32.mrb[0].mxu0
      %2310 = vmatprep.mubr.f32.mxu0 0.0
      %2311 = vmatmul.mubr.f32.gmra.mrb[0].mxu0 %v2150
      %v2312 = vpop.f32.mrb[0].mxu0
      %v2313 = vadd.f32 0.0, %v2312
      %v2314 = vpop.f32.mrb[0].mxu0
      %2315 = vmatprep.mubr.f32.mxu0 0.0
      %2316 = vmatmul.mubr.f32.gmra.mrb[0].mxu0 %v2152
      %v2317 = vpop.f32.mrb[0].mxu0
      %v2318 = vadd.f32 0.0, %v2317
      %v2319 = vpop.f32.mrb[0].mxu0
      %2320 = vmatprep.mubr.f32.mxu0 0.0
      %2321 = vmatmul.mubr.f32.gmra.mrb[0].mxu0 %v2154
      %v2322 = vpop.f32.mrb[0].mxu0
      %v2323 = vadd.f32 0.0, %v2322
      %v2324 = vpop.f32.mrb[0].mxu0
      %2325 = vmatprep.mubr.f32.mxu0 0.0
      %2326 = vmatmul.mubr.f32.gmra.mrb[0].mxu0 %v2156
      %v2327 = vpop.f32.mrb[0].mxu0
      %v2328 = vadd.f32 0.0, %v2327
      %v2329 = vpop.f32.mrb[0].mxu0
      %2330 = vmatprep.mubr.f32.mxu0 0.0
      %2331 = vmatmul.mubr.f32.gmra.mrb[0].mxu0 %v2158
      %v2332 = vpop.f32.mrb[0].mxu0
      %v2333 = vadd.f32 0.0, %v2332
      %v2334 = vpop.f32.mrb[0].mxu0
      %2335 = vmatprep.mubr.f32.mxu0 0.0
      %2336 = vmatmul.mubr.f32.gmra.mrb[0].mxu0 %v2160
      %v2337 = vpop.f32.mrb[0].mxu0
      %v2338 = vadd.f32 0.0, %v2337
      %v2339 = vpop.f32.mrb[0].mxu0
      %2340 = vmatprep.mubr.f32.mxu0 0.0
      %2341 = vmatmul.mubr.f32.gmra.mrb[0].mxu0 %v2162
      %v2342 = vpop.f32.mrb[0].mxu0
      %v2343 = vadd.f32 0.0, %v2342
      %v2344 = vpop.f32.mrb[0].mxu0
      %2345 = vmatprep.mubr.f32.mxu0 0.0
      %2346 = vmatmul.mubr.f32.gmra.mrb[0].mxu0 %v2164
      %v2347 = vpop.f32.mrb[0].mxu0
      %v2348 = vadd.f32 0.0, %v2347
      %v2349 = vpop.f32.mrb[0].mxu0
      %2350 = vmatprep.mubr.f32.mxu0 0.0
      %2351 = vmatmul.mubr.f32.gmra.mrb[0].mxu0 %v2166
      %v2352 = vpop.f32.mrb[0].mxu0
      %v2353 = vadd.f32 0.0, %v2352
      %v2354 = vpop.f32.mrb[0].mxu0
      %2355 = vmatprep.mubr.f32.mxu0 0.0
      %2356 = vmatmul.mubr.f32.gmra.mrb[0].mxu0 %v2168
      %v2357 = vpop.f32.mrb[0].mxu0
      %v2358 = vadd.f32 0.0, %v2357
      %v2359 = vpop.f32.mrb[0].mxu0
      %2360 = vmatprep.mubr.f32.mxu0 0.0
      %2361 = vmatmul.mubr.f32.gmra.mrb[0].mxu0 %v2170
      %v2362 = vpop.f32.mrb[0].mxu0
      %v2363 = vadd.f32 0.0, %v2362
      %v2364 = vpop.f32.mrb[0].mxu0
      %2365 = vdwg.mxu0
      %2366 = vst.msk [vmem:[%s143] sm:$0xff] %vm1007, %v2243
      %2367 = vst.msk [vmem:[%s143 + $0x8] sm:$0xff] %vm1007, %v2248
      %2368 = vst.msk [vmem:[%s143 + $0x10] sm:$0xff] %vm1007, %v2253
      %2369 = vst.msk [vmem:[%s143 + $0x18] sm:$0xff] %vm1007, %v2258
      %2370 = vst.msk [vmem:[%s143 + $0x20] sm:$0xff] %vm1007, %v2263
      %2371 = vst.msk [vmem:[%s143 + $0x28] sm:$0xff] %vm1007, %v2268
      %2372 = vst.msk [vmem:[%s143 + $0x30] sm:$0xff] %vm1007, %v2273
      %2373 = vst.msk [vmem:[%s143 + $0x38] sm:$0xff] %vm1007, %v2278
      %2374 = vst.msk [vmem:[%s143 + $0x40] sm:$0xff] %vm1007, %v2283
      %2375 = vst.msk [vmem:[%s143 + $0x48] sm:$0xff] %vm1007, %v2288
      %2376 = vst.msk [vmem:[%s143 + $0x50] sm:$0xff] %vm1007, %v2293
      %2377 = vst.msk [vmem:[%s143 + $0x58] sm:$0xff] %vm1007, %v2298
      %2378 = vst.msk [vmem:[%s143 + $0x60] sm:$0xff] %vm1007, %v2303
      %2379 = vst.msk [vmem:[%s143 + $0x68] sm:$0xff] %vm1007, %v2308
      %2380 = vst.msk [vmem:[%s143 + $0x70] sm:$0xff] %vm1007, %v2313
      %2381 = vst.msk [vmem:[%s143 + $0x78] sm:$0xff] %vm1007, %v2318
      %2382 = vst.msk [vmem:[%s143 + $0x80] sm:$0xff] %vm1007, %v2323
      %2383 = vst.msk [vmem:[%s143 + $0x88] sm:$0xff] %vm1007, %v2328
      %2384 = vst.msk [vmem:[%s143 + $0x90] sm:$0xff] %vm1007, %v2333
      %2385 = vst.msk [vmem:[%s143 + $0x98] sm:$0xff] %vm1007, %v2338
      %2386 = vst.msk [vmem:[%s143 + $0xa0] sm:$0xff] %vm1007, %v2343
      %2387 = vst.msk [vmem:[%s143 + $0xa8] sm:$0xff] %vm1007, %v2348
      %2388 = vst.msk [vmem:[%s143 + $0xb0] sm:$0xff] %vm1007, %v2353
      %2389 = vst.msk [vmem:[%s143 + $0xb8] sm:$0xff] %vm1007, %v2358
      %vm2390 = vcmask 60416
      %2391 = vst.msk [vmem:[%s143 + $0xc0] sm:$0xf] %vm2390, %v2363
      %p2392 = scmp.lt.s32.totalorder %s13, 1
      %s2393 = scalar_select %p2392, %s13, 1
      %s2394 = smul.addr %s2393, 25
      %s2395 = smul.addr %s2394, 8
      %s2396 = scalar_lea.vmem %s2, %s2395
      // Predicated region
      $region29: #{tpu_custom_call.1} parent=27 // pred_check
        %p2397 = pneg %p78
      $region30: #{tpu_custom_call.1} parent=27 // pred_check_branch
        %2399 = sbr.rel (%p2397) target = $region32
      $region31: #{tpu_custom_call.1} parent=27 // pred_region
        _
      $region32: #{tpu_custom_call.1} parent=27 // pred_fallthru
        _
    $region28: #{tpu_custom_call.1} parent=5 // pred_fallthru
      _
    %p2400 = scmp.le.s32.totalorder 2, %s8
    // Predicated region
    $region33: #{tpu_custom_call.1} parent=5 // pred_check
      %p2401 = pneg %p2400
    $region34: #{tpu_custom_call.1} parent=5 // pred_check_branch
      %2403 = sbr.rel (%p2401) target = $region36
    $region35: #{tpu_custom_call.1} parent=5 // pred_region
      %s2404 = ssub.s32 %s8, 2
      // Predicated region
      $region37: #{tpu_custom_call.1} parent=35 // pred_check
        %p2405 = pneg %p84
      $region38: #{tpu_custom_call.1} parent=35 // pred_check_branch
        %2407 = sbr.rel (%p2405) target = $region40
      $region39: #{tpu_custom_call.1} parent=35 // pred_region
        %p2408 = scmp.lt.s32.totalorder %s14, 1
        %s2409 = scalar_select %p2408, %s14, 1
        %s2410 = smul.addr %s2409, 25
        %s2411 = smul.addr %s2410, 8
        %s2412 = scalar_lea.vmem %s2, %s2411
      $region40: #{tpu_custom_call.1} parent=35 // pred_fallthru
        _
    $region36: #{tpu_custom_call.1} parent=5 // pred_fallthru
      _
  $region6: #{tpu_custom_call.1} parent=0 // loop_footer
    %s12 = sadd.s32 1, %s8
  $region7: #{tpu_custom_call.1} parent=0 // loop_footer_branch
    %7 = sbr.rel target = $region3
  $region8: #{tpu_custom_call.1} parent=0 // loop_exit
    _

</llo_original>
